<compile_context>
chip_gen: v6e
topology: v6e:2x2x1
jax: 0.10.0
libtpu: 0.0.40
codegen_flags: <defaults>
</compile_context>

<pallas_src>
import functools
import math

import jax
import jax.numpy as jnp
from jax.experimental import pallas as pl
from jax.experimental.pallas import tpu as pltpu


_VEC_KEYS = ("b_qkv", "b_out", "b_ff1", "b_ff2", "ln1_g", "ln1_b", "ln2_g", "ln2_b")


# ----------------------------- Fused Pallas kernel ---------------------------

def _fused_decoder_kernel(
    x_ref, pe_ref,
    w_qkv_ref, w_out_ref, w_ff1_ref, w_ff2_ref,
    vec_ref, w_proj_ref, b_proj_ref,
    o_ref,
    h_scratch,
    *, num_heads, eps,
):
    """One (batch_block, layer) grid step of the whole decoder forward.

    grid = (batch_blocks, num_layers); the layer axis is 'arbitrary' and the
    (Bt*S, D) activation is resident in VMEM scratch across it.  All per-layer
    weights use constant index maps, so they stay VMEM-resident for the whole
    grid and are indexed here with the layer id.
    """
    l = pl.program_id(1)
    n_layers = pl.num_programs(1)

    Bt, S, D = x_ref.shape
    T = Bt * S
    F = w_ff1_ref.shape[-1]
    H = num_heads
    dh = D // H
    scale = 1.0 / math.sqrt(dh)
    bf16 = jnp.bfloat16

    # Layer 0: fold the positional-encoding add in; activation becomes resident.
    @pl.when(l == 0)
    def _():
        h_scratch[...] = (x_ref[...] + pe_ref[...]).reshape(T, D)

    x = h_scratch[...]                                  # (T, D) f32, VMEM-resident

    # Per-layer weights (fetched once for the whole grid; dynamic layer index).
    w_qkv = w_qkv_ref[l]                                # (D, 3D) bf16
    w_out = w_out_ref[l]                                # (D, D)  bf16
    w_ff1 = w_ff1_ref[l]                                # (D, F)  bf16
    w_ff2 = w_ff2_ref[l]                                # (F, D)  bf16
    vec = vec_ref[l]                                    # (8, Pmax) f32, packed vectors
    b_qkv = vec[0:1, :3 * D]
    b_out = vec[1:2, :D]
    b_ff1 = vec[2:3, :F]
    b_ff2 = vec[3:4, :D]
    ln1_g, ln1_b = vec[4:5, :D], vec[5:6, :D]
    ln2_g, ln2_b = vec[6:7, :D], vec[7:8, :D]

    def layernorm(y, g, b):                             # f32 statistics
        mu = jnp.mean(y, axis=-1, keepdims=True)
        var = jnp.mean((y - mu) * (y - mu), axis=-1, keepdims=True)
        return (y - mu) * jax.lax.rsqrt(var + eps) * g + b

    # ---- multi-head self-attention: all tokens of the batch block as M ----
    qkv = jnp.dot(x.astype(bf16), w_qkv,
                  preferred_element_type=jnp.float32) + b_qkv        # (T, 3D) f32

    attn = b_out                                                     # (1, D) f32
    for h in range(H):
        q_h = qkv[:, h * dh:(h + 1) * dh].reshape(Bt, S, dh).astype(bf16)
        k_h = qkv[:, D + h * dh:D + (h + 1) * dh].reshape(Bt, S, dh).astype(bf16)
        v_h = qkv[:, 2 * D + h * dh:2 * D + (h + 1) * dh].reshape(Bt, S, dh).astype(bf16)
        # scores batched over the Bt samples of this block (contract on dh)
        s = jnp.einsum("bqd,bkd->bqk", q_h, k_h,
                       preferred_element_type=jnp.float32) * scale    # (Bt, S, S) f32
        m = jnp.max(s, axis=-1, keepdims=True)
        p = jnp.exp(s - m)
        p = p / jnp.sum(p, axis=-1, keepdims=True)                    # exact softmax
        o_h = jnp.einsum("bqk,bkd->bqd", p.astype(bf16), v_h,
                         preferred_element_type=jnp.float32)          # (Bt, S, dh)
        # accumulate through this head's rows of W_out -> no head concat
        attn = attn + jnp.dot(o_h.reshape(T, dh).astype(bf16),
                              w_out[h * dh:(h + 1) * dh, :],
                              preferred_element_type=jnp.float32)     # (T, D) f32

    # post-LN residual block 1 (f32)
    y = layernorm(x + attn, ln1_g, ln1_b)

    # ---- feed-forward ----
    h1 = jnp.dot(y.astype(bf16), w_ff1,
                 preferred_element_type=jnp.float32) + b_ff1          # (T, F) f32
    h1 = jnp.maximum(h1, 0.0).astype(bf16)                            # widest interm. in bf16
    h2 = jnp.dot(h1, w_ff2, preferred_element_type=jnp.float32) + b_ff2

    # post-LN residual block 2 (f32)
    y2 = layernorm(y + h2, ln2_g, ln2_b)
    h_scratch[...] = y2

    # Last layer: fused output projection; one unmasked 128-lane-aligned store.
    @pl.when(l == n_layers - 1)
    def _():
        out = jnp.dot(y2.astype(bf16), w_proj_ref[...],
                      preferred_element_type=jnp.float32) + b_proj_ref[...]
        o_ref[...] = out.reshape(Bt, S, -1).astype(o_ref.dtype)


# ----------------------------- Wrapper ---------------------------------------

def decoder_forward(x, pe, params, *, num_heads, num_layers, L, b_dim,
                    eps=1e-5, batch_blocks=1):
    # batch_blocks=1 is best on single-TensorCore chips (v5e/v6e); use 2 on v7x
    # so the 'parallel' batch axis feeds both TensorCores.
    B, S, D = x.shape
    assert B % batch_blocks == 0
    Bt = B // batch_blocks
    Lb = L * b_dim
    F = params["w_ff1"].shape[-1]
    nv = len(_VEC_KEYS)

    pe_s = pe[:, :S, :]                                              # (1, S, D)

    # Pack the small per-layer vectors into one (num_layers, nv, Pmax) buffer.
    Pmax = max(128, -(-max(3 * D, F, D) // 128) * 128)
    packed = jnp.concatenate(
        [jnp.pad(params[k], ((0, 0), (0, 0), (0, Pmax - params[k].shape[-1])))
         for k in _VEC_KEYS], axis=1)                                # (num_layers, nv, Pmax)

    # Lane-dense output: pad the projection to a multiple of 128 output lanes.
    Lb_pad = max(128, -(-Lb // 128) * 128)
    w_proj = jnp.pad(params["w_proj"], ((0, 0), (0, Lb_pad - Lb)))
    b_proj = jnp.pad(params["b_proj"], ((0, 0), (0, Lb_pad - Lb)))

    def resident(shape):                 # full-extent block, fetched once per grid
        nd = len(shape)
        return pl.BlockSpec(shape, lambda *_: (0,) * nd)

    in_specs = [
        pl.BlockSpec((Bt, S, D), lambda b, l: (b, 0, 0)),            # x (per batch block)
        pl.BlockSpec((1, S, D), lambda b, l: (0, 0, 0)),             # pe (shared)
        resident((num_layers, D, 3 * D)),                            # w_qkv
        resident((num_layers, D, D)),                                # w_out
        resident((num_layers, D, F)),                                # w_ff1
        resident((num_layers, F, D)),                                # w_ff2
        resident((num_layers, nv, Pmax)),                            # packed biases / LN
        resident((D, Lb_pad)),                                       # w_proj (padded)
        resident((1, Lb_pad)),                                       # b_proj (padded)
    ]

    out = pl.pallas_call(
        functools.partial(_fused_decoder_kernel, num_heads=num_heads, eps=eps),
        out_shape=jax.ShapeDtypeStruct((B, S, Lb_pad), jnp.float32),
        grid=(batch_blocks, num_layers),
        in_specs=in_specs,
        out_specs=pl.BlockSpec((Bt, S, Lb_pad), lambda b, l: (b, 0, 0)),
        scratch_shapes=[pltpu.VMEM((Bt * S, D), jnp.float32)],
        compiler_params=pltpu.CompilerParams(
            dimension_semantics=("parallel", "arbitrary"),
            # v7x-safe scoped VMEM budget; weights here are tiny and resident.
            vmem_limit_bytes=48 * 1024 * 1024),
    )(
        x, pe_s,
        params["w_qkv"], params["w_out"], params["w_ff1"], params["w_ff2"],
        packed, w_proj, b_proj,
    )
    return out[:, :, :Lb].reshape(B, S, L, b_dim)


# ----------------------------- Model setup ------------------------------------

def make_sine_pe(max_len, dim_model):
    # Matches PositionalEncoding (sine branch, even dim_model).
    position = jnp.arange(0, max_len, dtype=jnp.float32)[:, None]
    div_term = jnp.exp(jnp.arange(0, dim_model, 2, dtype=jnp.float32)
                       * (-math.log(10000.0) / dim_model))
    pe = jnp.zeros((max_len, dim_model), dtype=jnp.float32)
    pe = pe.at[:, 0::2].set(jnp.sin(position * div_term))
    pe = pe.at[:, 1::2].set(jnp.cos(position * div_term))
    return pe[None, :, :]  # (1, max_len, D)


def init_params(key, D, F, num_layers, Lb):
    std = 0.02
    ks = jax.random.split(key, 5)
    bf = jnp.bfloat16
    return dict(
        # stacked per-layer weights (bf16 for MXU), biases / LN params in f32
        w_qkv=(jax.random.normal(ks[0], (num_layers, D, 3 * D), jnp.float32) * std).astype(bf),
        b_qkv=jnp.zeros((num_layers, 1, 3 * D), jnp.float32),
        w_out=(jax.random.normal(ks[1], (num_layers, D, D), jnp.float32) * std).astype(bf),
        b_out=jnp.zeros((num_layers, 1, D), jnp.float32),
        w_ff1=(jax.random.normal(ks[2], (num_layers, D, F), jnp.float32) * std).astype(bf),
        b_ff1=jnp.zeros((num_layers, 1, F), jnp.float32),
        w_ff2=(jax.random.normal(ks[3], (num_layers, F, D), jnp.float32) * std).astype(bf),
        b_ff2=jnp.zeros((num_layers, 1, D), jnp.float32),
        ln1_g=jnp.ones((num_layers, 1, D), jnp.float32),
        ln1_b=jnp.zeros((num_layers, 1, D), jnp.float32),
        ln2_g=jnp.ones((num_layers, 1, D), jnp.float32),
        ln2_b=jnp.zeros((num_layers, 1, D), jnp.float32),
        w_proj=(jax.random.normal(ks[4], (D, Lb), jnp.float32) * std).astype(bf),
        b_proj=jnp.zeros((1, Lb), jnp.float32),
    )


# ----------------------------- Pure-JAX reference -----------------------------

def decoder_reference(x, pe, params, *, num_heads, num_layers, L, b_dim, eps=1e-5):
    B, S, D = x.shape
    dh = D // num_heads
    scale = 1.0 / math.sqrt(dh)

    def ln(y, g, b):
        mu = jnp.mean(y, axis=-1, keepdims=True)
        var = jnp.mean((y - mu) ** 2, axis=-1, keepdims=True)
        return (y - mu) * jax.lax.rsqrt(var + eps) * g + b

    h = x + pe[:, :S, :]
    for l in range(num_layers):
        qkv = h @ params["w_qkv"][l].astype(jnp.float32) + params["b_qkv"][l]
        q, k, v = jnp.split(qkv, 3, axis=-1)
        q = q.reshape(B, S, num_heads, dh).transpose(0, 2, 1, 3)
        k = k.reshape(B, S, num_heads, dh).transpose(0, 2, 1, 3)
        v = v.reshape(B, S, num_heads, dh).transpose(0, 2, 1, 3)
        s = jnp.einsum("bhqd,bhkd->bhqk", q, k) * scale
        p = jax.nn.softmax(s, axis=-1)
        a = jnp.einsum("bhqk,bhkd->bhqd", p, v).transpose(0, 2, 1, 3).reshape(B, S, D)
        a = a @ params["w_out"][l].astype(jnp.float32) + params["b_out"][l]
        h = ln(h + a, params["ln1_g"][l], params["ln1_b"][l])
        f = jnp.maximum(h @ params["w_ff1"][l].astype(jnp.float32) + params["b_ff1"][l], 0.0)
        f = f @ params["w_ff2"][l].astype(jnp.float32) + params["b_ff2"][l]
        h = ln(h + f, params["ln2_g"][l], params["ln2_b"][l])
    out = h @ params["w_proj"].astype(jnp.float32) + params["b_proj"]
    return out.reshape(B, S, L, b_dim)


# ----------------------------- Main -------------------------------------------

if __name__ == "__main__":
    # Decoder(input_dim=D, L, b, num_heads, num_layers, feature_dim)
    B, S = 2, 8
    D = 32            # input_dim
    num_heads = 4
    num_layers = 2
    F = 64            # feature_dim
    L, b_dim = 4, 8   # L, b
    max_len = 64

    key = jax.random.PRNGKey(0)
    kx, kp = jax.random.split(key)
    x = jax.random.normal(kx, (B, S, D), jnp.float32)

    pe = make_sine_pe(max_len, D)
    params = init_params(kp, D, F, num_layers, L * b_dim)

    fwd = jax.jit(functools.partial(
        decoder_forward, num_heads=num_heads, num_layers=num_layers,
        L=L, b_dim=b_dim, batch_blocks=1))
    y = jax.block_until_ready(fwd(x, pe, params))

    assert y.shape == (B, S, L, b_dim), y.shape
    assert bool(jnp.all(jnp.isfinite(y)))

    y_ref = decoder_reference(x, pe, params, num_heads=num_heads,
                              num_layers=num_layers, L=L, b_dim=b_dim)
    max_err = float(jnp.max(jnp.abs(y - y_ref)))
    assert max_err < 2e-2, f"max abs error vs reference: {max_err}"

    print("KERNEL_OK")
</pallas_src>

<mosaic_0001>
module attributes {stable_mosaic.version = 11 : i64} {
  func.func @_fused_decoder_kernel(%arg0: i32, %arg1: i32, %arg2: memref<2x8x32xf32, #tpu.memory_space<vmem>>, %arg3: memref<1x8x32xf32, #tpu.memory_space<vmem>>, %arg4: memref<2x32x96xbf16, #tpu.memory_space<vmem>>, %arg5: memref<2x32x32xbf16, #tpu.memory_space<vmem>>, %arg6: memref<2x32x64xbf16, #tpu.memory_space<vmem>>, %arg7: memref<2x64x32xbf16, #tpu.memory_space<vmem>>, %arg8: memref<2x8x128xf32, #tpu.memory_space<vmem>>, %arg9: memref<32x128xbf16, #tpu.memory_space<vmem>>, %arg10: memref<1x128xf32, #tpu.memory_space<vmem>>, %arg11: memref<2x8x128xf32, #tpu.memory_space<vmem>>, %arg12: memref<16x32xf32, #tpu.memory_space<vmem>>) attributes {dimension_semantics = [#tpu.dimension_semantics<parallel>, #tpu.dimension_semantics<arbitrary>], iteration_bounds = array<i64: 1, 2>, scalar_prefetch = 0 : i64, scratch_operands = 1 : i64, tpu.core_type = #tpu.core_type<tc>, window_params = [{transform_indices = @transform_0, window_bounds = array<i64: 2, 8, 32>}, {pipeline_mode = #tpu.pipeline_mode<synchronous>, transform_indices = @transform_1, window_bounds = array<i64: 1, 8, 32>}, {pipeline_mode = #tpu.pipeline_mode<synchronous>, transform_indices = @transform_2, window_bounds = array<i64: 2, 32, 96>}, {pipeline_mode = #tpu.pipeline_mode<synchronous>, transform_indices = @transform_3, window_bounds = array<i64: 2, 32, 32>}, {pipeline_mode = #tpu.pipeline_mode<synchronous>, transform_indices = @transform_4, window_bounds = array<i64: 2, 32, 64>}, {pipeline_mode = #tpu.pipeline_mode<synchronous>, transform_indices = @transform_5, window_bounds = array<i64: 2, 64, 32>}, {pipeline_mode = #tpu.pipeline_mode<synchronous>, transform_indices = @transform_6, window_bounds = array<i64: 2, 8, 128>}, {pipeline_mode = #tpu.pipeline_mode<synchronous>, transform_indices = @transform_7, window_bounds = array<i64: 32, 128>}, {pipeline_mode = #tpu.pipeline_mode<synchronous>, transform_indices = @transform_8, window_bounds = array<i64: 1, 128>}, {transform_indices = @transform_9, window_bounds = array<i64: 2, 8, 128>}]} {
    %c0_i32 = arith.constant 0 : i32
    %0 = arith.cmpi eq, %arg1, %c0_i32 : i32
    %1 = arith.extui %0 : i1 to i32
    %c0_i32_0 = arith.constant 0 : i32
    %2 = arith.cmpi ne, %1, %c0_i32_0 : i32
    scf.if %2 {
      %c0_52 = arith.constant 0 : index
      %c0_53 = arith.constant 0 : index
      %c0_54 = arith.constant 0 : index
      %208 = vector.load %arg2[%c0_52, %c0_53, %c0_54] : memref<2x8x32xf32, #tpu.memory_space<vmem>>, vector<2x8x32xf32>
      %c0_55 = arith.constant 0 : index
      %c0_56 = arith.constant 0 : index
      %c0_57 = arith.constant 0 : index
      %209 = vector.load %arg3[%c0_55, %c0_56, %c0_57] : memref<1x8x32xf32, #tpu.memory_space<vmem>>, vector<1x8x32xf32>
      %210 = vector.broadcast %209 : vector<1x8x32xf32> to vector<2x8x32xf32>
      %211 = arith.addf %208, %210 : vector<2x8x32xf32>
      %212 = vector.shape_cast %211 : vector<2x8x32xf32> to vector<16x32xf32>
      %c0_58 = arith.constant 0 : index
      %c0_59 = arith.constant 0 : index
      %213 = vector.load %arg12[%c0_58, %c0_59] : memref<16x32xf32, #tpu.memory_space<vmem>>, vector<16x32xf32>
      tpu.vector_store %arg12[%c0_58, %c0_59], %212 {strides = array<i32>} : memref<16x32xf32, #tpu.memory_space<vmem>>, vector<16x32xf32>,
    } else {
    }
    %c0 = arith.constant 0 : index
    %c0_1 = arith.constant 0 : index
    %3 = vector.load %arg12[%c0, %c0_1] : memref<16x32xf32, #tpu.memory_space<vmem>>, vector<16x32xf32>
    %4 = arith.index_cast %arg1 : i32 to index
    %c0_2 = arith.constant 0 : index
    %c0_3 = arith.constant 0 : index
    %5 = vector.load %arg4[%4, %c0_2, %c0_3] : memref<2x32x96xbf16, #tpu.memory_space<vmem>>, vector<1x32x96xbf16>
    %6 = vector.shape_cast %5 : vector<1x32x96xbf16> to vector<32x96xbf16>
    %7 = arith.index_cast %arg1 : i32 to index
    %c0_4 = arith.constant 0 : index
    %c0_5 = arith.constant 0 : index
    %8 = vector.load %arg5[%7, %c0_4, %c0_5] : memref<2x32x32xbf16, #tpu.memory_space<vmem>>, vector<1x32x32xbf16>
    %9 = vector.shape_cast %8 : vector<1x32x32xbf16> to vector<32x32xbf16>
    %10 = arith.index_cast %arg1 : i32 to index
    %c0_6 = arith.constant 0 : index
    %c0_7 = arith.constant 0 : index
    %11 = vector.load %arg6[%10, %c0_6, %c0_7] : memref<2x32x64xbf16, #tpu.memory_space<vmem>>, vector<1x32x64xbf16>
    %12 = vector.shape_cast %11 : vector<1x32x64xbf16> to vector<32x64xbf16>
    %13 = arith.index_cast %arg1 : i32 to index
    %c0_8 = arith.constant 0 : index
    %c0_9 = arith.constant 0 : index
    %14 = vector.load %arg7[%13, %c0_8, %c0_9] : memref<2x64x32xbf16, #tpu.memory_space<vmem>>, vector<1x64x32xbf16>
    %15 = vector.shape_cast %14 : vector<1x64x32xbf16> to vector<64x32xbf16>
    %16 = arith.index_cast %arg1 : i32 to index
    %c0_10 = arith.constant 0 : index
    %c0_11 = arith.constant 0 : index
    %17 = vector.load %arg8[%16, %c0_10, %c0_11] : memref<2x8x128xf32, #tpu.memory_space<vmem>>, vector<1x8x128xf32>
    %18 = vector.shape_cast %17 : vector<1x8x128xf32> to vector<8x128xf32>
    %19 = vector.extract_strided_slice %18 {offsets = [0, 0], sizes = [1, 96], strides = [1, 1]} : vector<8x128xf32> to vector<1x96xf32>
    %20 = vector.extract_strided_slice %18 {offsets = [1, 0], sizes = [1, 32], strides = [1, 1]} : vector<8x128xf32> to vector<1x32xf32>
    %21 = vector.extract_strided_slice %18 {offsets = [2, 0], sizes = [1, 64], strides = [1, 1]} : vector<8x128xf32> to vector<1x64xf32>
    %22 = vector.extract_strided_slice %18 {offsets = [3, 0], sizes = [1, 32], strides = [1, 1]} : vector<8x128xf32> to vector<1x32xf32>
    %23 = vector.extract_strided_slice %18 {offsets = [4, 0], sizes = [1, 32], strides = [1, 1]} : vector<8x128xf32> to vector<1x32xf32>
    %24 = vector.extract_strided_slice %18 {offsets = [5, 0], sizes = [1, 32], strides = [1, 1]} : vector<8x128xf32> to vector<1x32xf32>
    %25 = vector.extract_strided_slice %18 {offsets = [6, 0], sizes = [1, 32], strides = [1, 1]} : vector<8x128xf32> to vector<1x32xf32>
    %26 = vector.extract_strided_slice %18 {offsets = [7, 0], sizes = [1, 32], strides = [1, 1]} : vector<8x128xf32> to vector<1x32xf32>
    %27 = arith.truncf %3 : vector<16x32xf32> to vector<16x32xbf16>
    %cst = arith.constant dense<0.000000e+00> : vector<16x96xf32>
    %28 = tpu.matmul %27, %6, %cst {dimension_numbers = #tpu.dot_dimension_numbers<[1], [0], [0], [1], [0, 0, 1, 1], [], []>} : vector<16x32xbf16>, vector<32x96xbf16>, vector<16x96xf32> -> vector<16x96xf32>
    %29 = vector.broadcast %19 : vector<1x96xf32> to vector<16x96xf32>
    %30 = arith.addf %28, %29 : vector<16x96xf32>
    %31 = vector.extract_strided_slice %30 {offsets = [0, 0], sizes = [16, 8], strides = [1, 1]} : vector<16x96xf32> to vector<16x8xf32>
    %32 = vector.shape_cast %31 : vector<16x8xf32> to vector<2x8x8xf32>
    %33 = arith.truncf %32 : vector<2x8x8xf32> to vector<2x8x8xbf16>
    %34 = vector.extract_strided_slice %30 {offsets = [0, 32], sizes = [16, 8], strides = [1, 1]} : vector<16x96xf32> to vector<16x8xf32>
    %35 = vector.shape_cast %34 : vector<16x8xf32> to vector<2x8x8xf32>
    %36 = arith.truncf %35 : vector<2x8x8xf32> to vector<2x8x8xbf16>
    %37 = vector.extract_strided_slice %30 {offsets = [0, 64], sizes = [16, 8], strides = [1, 1]} : vector<16x96xf32> to vector<16x8xf32>
    %38 = vector.shape_cast %37 : vector<16x8xf32> to vector<2x8x8xf32>
    %39 = arith.truncf %38 : vector<2x8x8xf32> to vector<2x8x8xbf16>
    "tpu.trace_start"() <{level = 10 : i32, message = "bqd,bkd->bqk"}> : () -> ()
    %cst_12 = arith.constant dense<0.000000e+00> : vector<2x8x8xf32>
    %40 = tpu.matmul %33, %36, %cst_12 {dimension_numbers = #tpu.dot_dimension_numbers<[2], [2], [1], [1], [0, 0, 0, 1, 1, 1], [0], [0]>} : vector<2x8x8xbf16>, vector<2x8x8xbf16>, vector<2x8x8xf32> -> vector<2x8x8xf32>
    "tpu.trace_stop"() : () -> ()
    %cst_13 = arith.constant 0.353553385 : f32
    %41 = vector.broadcast %cst_13 : f32 to vector<2x8x8xf32>
    %42 = arith.mulf %40, %41 : vector<2x8x8xf32>
    %cst_14 = arith.constant dense<0xFF800000> : vector<2x8xf32>
    %43 = vector.multi_reduction <maximumf>, %42, %cst_14 [2] : vector<2x8x8xf32> to vector<2x8xf32>
    %44 = vector.shape_cast %43 : vector<2x8xf32> to vector<2x8x1xf32>
    %45 = vector.broadcast %44 : vector<2x8x1xf32> to vector<2x8x8xf32>
    %46 = arith.subf %42, %45 : vector<2x8x8xf32>
    %47 = math.exp %46 : vector<2x8x8xf32>
    %cst_15 = arith.constant dense<0.000000e+00> : vector<2x8xf32>
    %48 = vector.multi_reduction <add>, %47, %cst_15 [2] : vector<2x8x8xf32> to vector<2x8xf32>
    %49 = vector.shape_cast %48 : vector<2x8xf32> to vector<2x8x1xf32>
    %50 = vector.broadcast %49 : vector<2x8x1xf32> to vector<2x8x8xf32>
    %51 = arith.divf %47, %50 : vector<2x8x8xf32>
    %52 = arith.truncf %51 : vector<2x8x8xf32> to vector<2x8x8xbf16>
    "tpu.trace_start"() <{level = 10 : i32, message = "bqk,bkd->bqd"}> : () -> ()
    %cst_16 = arith.constant dense<0.000000e+00> : vector<2x8x8xf32>
    %53 = tpu.matmul %52, %39, %cst_16 {dimension_numbers = #tpu.dot_dimension_numbers<[2], [1], [1], [2], [0, 0, 0, 1, 1, 2], [0], [0]>} : vector<2x8x8xbf16>, vector<2x8x8xbf16>, vector<2x8x8xf32> -> vector<2x8x8xf32>
    "tpu.trace_stop"() : () -> ()
    %54 = vector.shape_cast %53 : vector<2x8x8xf32> to vector<16x8xf32>
    %55 = arith.truncf %54 : vector<16x8xf32> to vector<16x8xbf16>
    %56 = vector.extract_strided_slice %9 {offsets = [0, 0], sizes = [8, 32], strides = [1, 1]} : vector<32x32xbf16> to vector<8x32xbf16>
    %cst_17 = arith.constant dense<0.000000e+00> : vector<16x32xf32>
    %57 = tpu.matmul %55, %56, %cst_17 {dimension_numbers = #tpu.dot_dimension_numbers<[1], [0], [0], [1], [0, 0, 1, 1], [], []>} : vector<16x8xbf16>, vector<8x32xbf16>, vector<16x32xf32> -> vector<16x32xf32>
    %58 = vector.broadcast %20 : vector<1x32xf32> to vector<16x32xf32>
    %59 = arith.addf %58, %57 : vector<16x32xf32>
    %60 = vector.extract_strided_slice %30 {offsets = [0, 8], sizes = [16, 8], strides = [1, 1]} : vector<16x96xf32> to vector<16x8xf32>
    %61 = vector.shape_cast %60 : vector<16x8xf32> to vector<2x8x8xf32>
    %62 = arith.truncf %61 : vector<2x8x8xf32> to vector<2x8x8xbf16>
    %63 = vector.extract_strided_slice %30 {offsets = [0, 40], sizes = [16, 8], strides = [1, 1]} : vector<16x96xf32> to vector<16x8xf32>
    %64 = vector.shape_cast %63 : vector<16x8xf32> to vector<2x8x8xf32>
    %65 = arith.truncf %64 : vector<2x8x8xf32> to vector<2x8x8xbf16>
    %66 = vector.extract_strided_slice %30 {offsets = [0, 72], sizes = [16, 8], strides = [1, 1]} : vector<16x96xf32> to vector<16x8xf32>
    %67 = vector.shape_cast %66 : vector<16x8xf32> to vector<2x8x8xf32>
    %68 = arith.truncf %67 : vector<2x8x8xf32> to vector<2x8x8xbf16>
    "tpu.trace_start"() <{level = 10 : i32, message = "bqd,bkd->bqk"}> : () -> ()
    %cst_18 = arith.constant dense<0.000000e+00> : vector<2x8x8xf32>
    %69 = tpu.matmul %62, %65, %cst_18 {dimension_numbers = #tpu.dot_dimension_numbers<[2], [2], [1], [1], [0, 0, 0, 1, 1, 1], [0], [0]>} : vector<2x8x8xbf16>, vector<2x8x8xbf16>, vector<2x8x8xf32> -> vector<2x8x8xf32>
    "tpu.trace_stop"() : () -> ()
    %cst_19 = arith.constant 0.353553385 : f32
    %70 = vector.broadcast %cst_19 : f32 to vector<2x8x8xf32>
    %71 = arith.mulf %69, %70 : vector<2x8x8xf32>
    %cst_20 = arith.constant dense<0xFF800000> : vector<2x8xf32>
    %72 = vector.multi_reduction <maximumf>, %71, %cst_20 [2] : vector<2x8x8xf32> to vector<2x8xf32>
    %73 = vector.shape_cast %72 : vector<2x8xf32> to vector<2x8x1xf32>
    %74 = vector.broadcast %73 : vector<2x8x1xf32> to vector<2x8x8xf32>
    %75 = arith.subf %71, %74 : vector<2x8x8xf32>
    %76 = math.exp %75 : vector<2x8x8xf32>
    %cst_21 = arith.constant dense<0.000000e+00> : vector<2x8xf32>
    %77 = vector.multi_reduction <add>, %76, %cst_21 [2] : vector<2x8x8xf32> to vector<2x8xf32>
    %78 = vector.shape_cast %77 : vector<2x8xf32> to vector<2x8x1xf32>
    %79 = vector.broadcast %78 : vector<2x8x1xf32> to vector<2x8x8xf32>
    %80 = arith.divf %76, %79 : vector<2x8x8xf32>
    %81 = arith.truncf %80 : vector<2x8x8xf32> to vector<2x8x8xbf16>
    "tpu.trace_start"() <{level = 10 : i32, message = "bqk,bkd->bqd"}> : () -> ()
    %cst_22 = arith.constant dense<0.000000e+00> : vector<2x8x8xf32>
    %82 = tpu.matmul %81, %68, %cst_22 {dimension_numbers = #tpu.dot_dimension_numbers<[2], [1], [1], [2], [0, 0, 0, 1, 1, 2], [0], [0]>} : vector<2x8x8xbf16>, vector<2x8x8xbf16>, vector<2x8x8xf32> -> vector<2x8x8xf32>
    "tpu.trace_stop"() : () -> ()
    %83 = vector.shape_cast %82 : vector<2x8x8xf32> to vector<16x8xf32>
    %84 = arith.truncf %83 : vector<16x8xf32> to vector<16x8xbf16>
    %85 = vector.extract_strided_slice %9 {offsets = [8, 0], sizes = [8, 32], strides = [1, 1]} : vector<32x32xbf16> to vector<8x32xbf16>
    %cst_23 = arith.constant dense<0.000000e+00> : vector<16x32xf32>
    %86 = tpu.matmul %84, %85, %cst_23 {dimension_numbers = #tpu.dot_dimension_numbers<[1], [0], [0], [1], [0, 0, 1, 1], [], []>} : vector<16x8xbf16>, vector<8x32xbf16>, vector<16x32xf32> -> vector<16x32xf32>
    %87 = arith.addf %59, %86 : vector<16x32xf32>
    %88 = vector.extract_strided_slice %30 {offsets = [0, 16], sizes = [16, 8], strides = [1, 1]} : vector<16x96xf32> to vector<16x8xf32>
    %89 = vector.shape_cast %88 : vector<16x8xf32> to vector<2x8x8xf32>
    %90 = arith.truncf %89 : vector<2x8x8xf32> to vector<2x8x8xbf16>
    %91 = vector.extract_strided_slice %30 {offsets = [0, 48], sizes = [16, 8], strides = [1, 1]} : vector<16x96xf32> to vector<16x8xf32>
    %92 = vector.shape_cast %91 : vector<16x8xf32> to vector<2x8x8xf32>
    %93 = arith.truncf %92 : vector<2x8x8xf32> to vector<2x8x8xbf16>
    %94 = vector.extract_strided_slice %30 {offsets = [0, 80], sizes = [16, 8], strides = [1, 1]} : vector<16x96xf32> to vector<16x8xf32>
    %95 = vector.shape_cast %94 : vector<16x8xf32> to vector<2x8x8xf32>
    %96 = arith.truncf %95 : vector<2x8x8xf32> to vector<2x8x8xbf16>
    "tpu.trace_start"() <{level = 10 : i32, message = "bqd,bkd->bqk"}> : () -> ()
    %cst_24 = arith.constant dense<0.000000e+00> : vector<2x8x8xf32>
    %97 = tpu.matmul %90, %93, %cst_24 {dimension_numbers = #tpu.dot_dimension_numbers<[2], [2], [1], [1], [0, 0, 0, 1, 1, 1], [0], [0]>} : vector<2x8x8xbf16>, vector<2x8x8xbf16>, vector<2x8x8xf32> -> vector<2x8x8xf32>
    "tpu.trace_stop"() : () -> ()
    %cst_25 = arith.constant 0.353553385 : f32
    %98 = vector.broadcast %cst_25 : f32 to vector<2x8x8xf32>
    %99 = arith.mulf %97, %98 : vector<2x8x8xf32>
    %cst_26 = arith.constant dense<0xFF800000> : vector<2x8xf32>
    %100 = vector.multi_reduction <maximumf>, %99, %cst_26 [2] : vector<2x8x8xf32> to vector<2x8xf32>
    %101 = vector.shape_cast %100 : vector<2x8xf32> to vector<2x8x1xf32>
    %102 = vector.broadcast %101 : vector<2x8x1xf32> to vector<2x8x8xf32>
    %103 = arith.subf %99, %102 : vector<2x8x8xf32>
    %104 = math.exp %103 : vector<2x8x8xf32>
    %cst_27 = arith.constant dense<0.000000e+00> : vector<2x8xf32>
    %105 = vector.multi_reduction <add>, %104, %cst_27 [2] : vector<2x8x8xf32> to vector<2x8xf32>
    %106 = vector.shape_cast %105 : vector<2x8xf32> to vector<2x8x1xf32>
    %107 = vector.broadcast %106 : vector<2x8x1xf32> to vector<2x8x8xf32>
    %108 = arith.divf %104, %107 : vector<2x8x8xf32>
    %109 = arith.truncf %108 : vector<2x8x8xf32> to vector<2x8x8xbf16>
    "tpu.trace_start"() <{level = 10 : i32, message = "bqk,bkd->bqd"}> : () -> ()
    %cst_28 = arith.constant dense<0.000000e+00> : vector<2x8x8xf32>
    %110 = tpu.matmul %109, %96, %cst_28 {dimension_numbers = #tpu.dot_dimension_numbers<[2], [1], [1], [2], [0, 0, 0, 1, 1, 2], [0], [0]>} : vector<2x8x8xbf16>, vector<2x8x8xbf16>, vector<2x8x8xf32> -> vector<2x8x8xf32>
    "tpu.trace_stop"() : () -> ()
    %111 = vector.shape_cast %110 : vector<2x8x8xf32> to vector<16x8xf32>
    %112 = arith.truncf %111 : vector<16x8xf32> to vector<16x8xbf16>
    %113 = vector.extract_strided_slice %9 {offsets = [16, 0], sizes = [8, 32], strides = [1, 1]} : vector<32x32xbf16> to vector<8x32xbf16>
    %cst_29 = arith.constant dense<0.000000e+00> : vector<16x32xf32>
    %114 = tpu.matmul %112, %113, %cst_29 {dimension_numbers = #tpu.dot_dimension_numbers<[1], [0], [0], [1], [0, 0, 1, 1], [], []>} : vector<16x8xbf16>, vector<8x32xbf16>, vector<16x32xf32> -> vector<16x32xf32>
    %115 = arith.addf %87, %114 : vector<16x32xf32>
    %116 = vector.extract_strided_slice %30 {offsets = [0, 24], sizes = [16, 8], strides = [1, 1]} : vector<16x96xf32> to vector<16x8xf32>
    %117 = vector.shape_cast %116 : vector<16x8xf32> to vector<2x8x8xf32>
    %118 = arith.truncf %117 : vector<2x8x8xf32> to vector<2x8x8xbf16>
    %119 = vector.extract_strided_slice %30 {offsets = [0, 56], sizes = [16, 8], strides = [1, 1]} : vector<16x96xf32> to vector<16x8xf32>
    %120 = vector.shape_cast %119 : vector<16x8xf32> to vector<2x8x8xf32>
    %121 = arith.truncf %120 : vector<2x8x8xf32> to vector<2x8x8xbf16>
    %122 = vector.extract_strided_slice %30 {offsets = [0, 88], sizes = [16, 8], strides = [1, 1]} : vector<16x96xf32> to vector<16x8xf32>
    %123 = vector.shape_cast %122 : vector<16x8xf32> to vector<2x8x8xf32>
    %124 = arith.truncf %123 : vector<2x8x8xf32> to vector<2x8x8xbf16>
    "tpu.trace_start"() <{level = 10 : i32, message = "bqd,bkd->bqk"}> : () -> ()
    %cst_30 = arith.constant dense<0.000000e+00> : vector<2x8x8xf32>
    %125 = tpu.matmul %118, %121, %cst_30 {dimension_numbers = #tpu.dot_dimension_numbers<[2], [2], [1], [1], [0, 0, 0, 1, 1, 1], [0], [0]>} : vector<2x8x8xbf16>, vector<2x8x8xbf16>, vector<2x8x8xf32> -> vector<2x8x8xf32>
    "tpu.trace_stop"() : () -> ()
    %cst_31 = arith.constant 0.353553385 : f32
    %126 = vector.broadcast %cst_31 : f32 to vector<2x8x8xf32>
    %127 = arith.mulf %125, %126 : vector<2x8x8xf32>
    %cst_32 = arith.constant dense<0xFF800000> : vector<2x8xf32>
    %128 = vector.multi_reduction <maximumf>, %127, %cst_32 [2] : vector<2x8x8xf32> to vector<2x8xf32>
    %129 = vector.shape_cast %128 : vector<2x8xf32> to vector<2x8x1xf32>
    %130 = vector.broadcast %129 : vector<2x8x1xf32> to vector<2x8x8xf32>
    %131 = arith.subf %127, %130 : vector<2x8x8xf32>
    %132 = math.exp %131 : vector<2x8x8xf32>
    %cst_33 = arith.constant dense<0.000000e+00> : vector<2x8xf32>
    %133 = vector.multi_reduction <add>, %132, %cst_33 [2] : vector<2x8x8xf32> to vector<2x8xf32>
    %134 = vector.shape_cast %133 : vector<2x8xf32> to vector<2x8x1xf32>
    %135 = vector.broadcast %134 : vector<2x8x1xf32> to vector<2x8x8xf32>
    %136 = arith.divf %132, %135 : vector<2x8x8xf32>
    %137 = arith.truncf %136 : vector<2x8x8xf32> to vector<2x8x8xbf16>
    "tpu.trace_start"() <{level = 10 : i32, message = "bqk,bkd->bqd"}> : () -> ()
    %cst_34 = arith.constant dense<0.000000e+00> : vector<2x8x8xf32>
    %138 = tpu.matmul %137, %124, %cst_34 {dimension_numbers = #tpu.dot_dimension_numbers<[2], [1], [1], [2], [0, 0, 0, 1, 1, 2], [0], [0]>} : vector<2x8x8xbf16>, vector<2x8x8xbf16>, vector<2x8x8xf32> -> vector<2x8x8xf32>
    "tpu.trace_stop"() : () -> ()
    %139 = vector.shape_cast %138 : vector<2x8x8xf32> to vector<16x8xf32>
    %140 = arith.truncf %139 : vector<16x8xf32> to vector<16x8xbf16>
    %141 = vector.extract_strided_slice %9 {offsets = [24, 0], sizes = [8, 32], strides = [1, 1]} : vector<32x32xbf16> to vector<8x32xbf16>
    %cst_35 = arith.constant dense<0.000000e+00> : vector<16x32xf32>
    %142 = tpu.matmul %140, %141, %cst_35 {dimension_numbers = #tpu.dot_dimension_numbers<[1], [0], [0], [1], [0, 0, 1, 1], [], []>} : vector<16x8xbf16>, vector<8x32xbf16>, vector<16x32xf32> -> vector<16x32xf32>
    %143 = arith.addf %115, %142 : vector<16x32xf32>
    %144 = arith.addf %3, %143 : vector<16x32xf32>
    %cst_36 = arith.constant dense<0.000000e+00> : vector<16xf32>
    %145 = vector.multi_reduction <add>, %144, %cst_36 [1] : vector<16x32xf32> to vector<16xf32>
    %146 = vector.shape_cast %145 : vector<16xf32> to vector<16x1xf32>
    %cst_37 = arith.constant 3.200000e+01 : f32
    %147 = vector.broadcast %cst_37 : f32 to vector<16x1xf32>
    %148 = arith.divf %146, %147 : vector<16x1xf32>
    %149 = vector.broadcast %148 : vector<16x1xf32> to vector<16x32xf32>
    %150 = arith.subf %144, %149 : vector<16x32xf32>
    %151 = vector.broadcast %148 : vector<16x1xf32> to vector<16x32xf32>
    %152 = arith.subf %144, %151 : vector<16x32xf32>
    %153 = arith.mulf %150, %152 : vector<16x32xf32>
    %cst_38 = arith.constant dense<0.000000e+00> : vector<16xf32>
    %154 = vector.multi_reduction <add>, %153, %cst_38 [1] : vector<16x32xf32> to vector<16xf32>
    %155 = vector.shape_cast %154 : vector<16xf32> to vector<16x1xf32>
    %cst_39 = arith.constant 3.200000e+01 : f32
    %156 = vector.broadcast %cst_39 : f32 to vector<16x1xf32>
    %157 = arith.divf %155, %156 : vector<16x1xf32>
    %158 = vector.broadcast %148 : vector<16x1xf32> to vector<16x32xf32>
    %159 = arith.subf %144, %158 : vector<16x32xf32>
    %cst_40 = arith.constant 9.99999974E-6 : f32
    %160 = vector.broadcast %cst_40 : f32 to vector<16x1xf32>
    %161 = arith.addf %157, %160 : vector<16x1xf32>
    %162 = math.rsqrt %161 : vector<16x1xf32>
    %163 = vector.broadcast %162 : vector<16x1xf32> to vector<16x32xf32>
    %164 = arith.mulf %159, %163 : vector<16x32xf32>
    %165 = vector.broadcast %23 : vector<1x32xf32> to vector<16x32xf32>
    %166 = arith.mulf %164, %165 : vector<16x32xf32>
    %167 = vector.broadcast %24 : vector<1x32xf32> to vector<16x32xf32>
    %168 = arith.addf %166, %167 : vector<16x32xf32>
    %169 = arith.truncf %168 : vector<16x32xf32> to vector<16x32xbf16>
    %cst_41 = arith.constant dense<0.000000e+00> : vector<16x64xf32>
    %170 = tpu.matmul %169, %12, %cst_41 {dimension_numbers = #tpu.dot_dimension_numbers<[1], [0], [0], [1], [0, 0, 1, 1], [], []>} : vector<16x32xbf16>, vector<32x64xbf16>, vector<16x64xf32> -> vector<16x64xf32>
    %171 = vector.broadcast %21 : vector<1x64xf32> to vector<16x64xf32>
    %172 = arith.addf %170, %171 : vector<16x64xf32>
    %cst_42 = arith.constant 0.000000e+00 : f32
    %173 = vector.broadcast %cst_42 : f32 to vector<16x64xf32>
    %174 = arith.maximumf %172, %173 : vector<16x64xf32>
    %175 = arith.truncf %174 : vector<16x64xf32> to vector<16x64xbf16>
    %cst_43 = arith.constant dense<0.000000e+00> : vector<16x32xf32>
    %176 = tpu.matmul %175, %15, %cst_43 {dimension_numbers = #tpu.dot_dimension_numbers<[1], [0], [0], [1], [0, 0, 1, 1], [], []>} : vector<16x64xbf16>, vector<64x32xbf16>, vector<16x32xf32> -> vector<16x32xf32>
    %177 = vector.broadcast %22 : vector<1x32xf32> to vector<16x32xf32>
    %178 = arith.addf %176, %177 : vector<16x32xf32>
    %179 = arith.addf %168, %178 : vector<16x32xf32>
    %cst_44 = arith.constant dense<0.000000e+00> : vector<16xf32>
    %180 = vector.multi_reduction <add>, %179, %cst_44 [1] : vector<16x32xf32> to vector<16xf32>
    %181 = vector.shape_cast %180 : vector<16xf32> to vector<16x1xf32>
    %cst_45 = arith.constant 3.200000e+01 : f32
    %182 = vector.broadcast %cst_45 : f32 to vector<16x1xf32>
    %183 = arith.divf %181, %182 : vector<16x1xf32>
    %184 = vector.broadcast %183 : vector<16x1xf32> to vector<16x32xf32>
    %185 = arith.subf %179, %184 : vector<16x32xf32>
    %186 = vector.broadcast %183 : vector<16x1xf32> to vector<16x32xf32>
    %187 = arith.subf %179, %186 : vector<16x32xf32>
    %188 = arith.mulf %185, %187 : vector<16x32xf32>
    %cst_46 = arith.constant dense<0.000000e+00> : vector<16xf32>
    %189 = vector.multi_reduction <add>, %188, %cst_46 [1] : vector<16x32xf32> to vector<16xf32>
    %190 = vector.shape_cast %189 : vector<16xf32> to vector<16x1xf32>
    %cst_47 = arith.constant 3.200000e+01 : f32
    %191 = vector.broadcast %cst_47 : f32 to vector<16x1xf32>
    %192 = arith.divf %190, %191 : vector<16x1xf32>
    %193 = vector.broadcast %183 : vector<16x1xf32> to vector<16x32xf32>
    %194 = arith.subf %179, %193 : vector<16x32xf32>
    %cst_48 = arith.constant 9.99999974E-6 : f32
    %195 = vector.broadcast %cst_48 : f32 to vector<16x1xf32>
    %196 = arith.addf %192, %195 : vector<16x1xf32>
    %197 = math.rsqrt %196 : vector<16x1xf32>
    %198 = vector.broadcast %197 : vector<16x1xf32> to vector<16x32xf32>
    %199 = arith.mulf %194, %198 : vector<16x32xf32>
    %200 = vector.broadcast %25 : vector<1x32xf32> to vector<16x32xf32>
    %201 = arith.mulf %199, %200 : vector<16x32xf32>
    %202 = vector.broadcast %26 : vector<1x32xf32> to vector<16x32xf32>
    %203 = arith.addf %201, %202 : vector<16x32xf32>
    %c0_49 = arith.constant 0 : index
    %c0_50 = arith.constant 0 : index
    %204 = vector.load %arg12[%c0_49, %c0_50] : memref<16x32xf32, #tpu.memory_space<vmem>>, vector<16x32xf32>
    tpu.vector_store %arg12[%c0_49, %c0_50], %203 {strides = array<i32>} : memref<16x32xf32, #tpu.memory_space<vmem>>, vector<16x32xf32>,
    %c1_i32 = arith.constant 1 : i32
    %205 = arith.cmpi eq, %arg1, %c1_i32 : i32
    %206 = arith.extui %205 : i1 to i32
    %c0_i32_51 = arith.constant 0 : i32
    %207 = arith.cmpi ne, %206, %c0_i32_51 : i32
    scf.if %207 {
      %208 = arith.truncf %203 : vector<16x32xf32> to vector<16x32xbf16>
      %c0_52 = arith.constant 0 : index
      %c0_53 = arith.constant 0 : index
      %209 = vector.load %arg9[%c0_52, %c0_53] : memref<32x128xbf16, #tpu.memory_space<vmem>>, vector<32x128xbf16>
      %cst_54 = arith.constant dense<0.000000e+00> : vector<16x128xf32>
      %210 = tpu.matmul %208, %209, %cst_54 {dimension_numbers = #tpu.dot_dimension_numbers<[1], [0], [0], [1], [0, 0, 1, 1], [], []>} : vector<16x32xbf16>, vector<32x128xbf16>, vector<16x128xf32> -> vector<16x128xf32>
      %c0_55 = arith.constant 0 : index
      %c0_56 = arith.constant 0 : index
      %211 = vector.load %arg10[%c0_55, %c0_56] : memref<1x128xf32, #tpu.memory_space<vmem>>, vector<1x128xf32>
      %212 = vector.broadcast %211 : vector<1x128xf32> to vector<16x128xf32>
      %213 = arith.addf %210, %212 : vector<16x128xf32>
      %214 = vector.shape_cast %213 : vector<16x128xf32> to vector<2x8x128xf32>
      %c0_57 = arith.constant 0 : index
      %c0_58 = arith.constant 0 : index
      %c0_59 = arith.constant 0 : index
      %215 = vector.load %arg11[%c0_57, %c0_58, %c0_59] : memref<2x8x128xf32, #tpu.memory_space<vmem>>, vector<2x8x128xf32>
      tpu.vector_store %arg11[%c0_57, %c0_58, %c0_59], %214 {strides = array<i32>} : memref<2x8x128xf32, #tpu.memory_space<vmem>>, vector<2x8x128xf32>,
    } else {
    }
    return
  }
  func.func @transform_0(%arg0: i32, %arg1: i32) -> (i32, i32, i32) {
    %c0_i32 = arith.constant 0 : i32
    %c0_i32_0 = arith.constant 0 : i32
    %c0_i32_1 = arith.constant 0 : i32
    return %arg0, %c0_i32, %c0_i32_0 : i32, i32, i32
  }
  func.func @transform_1(%arg0: i32, %arg1: i32) -> (i32, i32, i32) {
    %c0_i32 = arith.constant 0 : i32
    %c0_i32_0 = arith.constant 0 : i32
    %c0_i32_1 = arith.constant 0 : i32
    %c0_i32_2 = arith.constant 0 : i32
    return %c0_i32, %c0_i32_0, %c0_i32_1 : i32, i32, i32
  }
  func.func @transform_2(%arg0: i32, %arg1: i32) -> (i32, i32, i32) {
    %c0_i32 = arith.constant 0 : i32
    %c0_i32_0 = arith.constant 0 : i32
    %c0_i32_1 = arith.constant 0 : i32
    %c0_i32_2 = arith.constant 0 : i32
    return %c0_i32, %c0_i32_0, %c0_i32_1 : i32, i32, i32
  }
  func.func @transform_3(%arg0: i32, %arg1: i32) -> (i32, i32, i32) {
    %c0_i32 = arith.constant 0 : i32
    %c0_i32_0 = arith.constant 0 : i32
    %c0_i32_1 = arith.constant 0 : i32
    %c0_i32_2 = arith.constant 0 : i32
    return %c0_i32, %c0_i32_0, %c0_i32_1 : i32, i32, i32
  }
  func.func @transform_4(%arg0: i32, %arg1: i32) -> (i32, i32, i32) {
    %c0_i32 = arith.constant 0 : i32
    %c0_i32_0 = arith.constant 0 : i32
    %c0_i32_1 = arith.constant 0 : i32
    %c0_i32_2 = arith.constant 0 : i32
    return %c0_i32, %c0_i32_0, %c0_i32_1 : i32, i32, i32
  }
  func.func @transform_5(%arg0: i32, %arg1: i32) -> (i32, i32, i32) {
    %c0_i32 = arith.constant 0 : i32
    %c0_i32_0 = arith.constant 0 : i32
    %c0_i32_1 = arith.constant 0 : i32
    %c0_i32_2 = arith.constant 0 : i32
    return %c0_i32, %c0_i32_0, %c0_i32_1 : i32, i32, i32
  }
  func.func @transform_6(%arg0: i32, %arg1: i32) -> (i32, i32, i32) {
    %c0_i32 = arith.constant 0 : i32
    %c0_i32_0 = arith.constant 0 : i32
    %c0_i32_1 = arith.constant 0 : i32
    %c0_i32_2 = arith.constant 0 : i32
    return %c0_i32, %c0_i32_0, %c0_i32_1 : i32, i32, i32
  }
  func.func @transform_7(%arg0: i32, %arg1: i32) -> (i32, i32) {
    %c0_i32 = arith.constant 0 : i32
    %c0_i32_0 = arith.constant 0 : i32
    %c0_i32_1 = arith.constant 0 : i32
    return %c0_i32, %c0_i32_0 : i32, i32
  }
  func.func @transform_8(%arg0: i32, %arg1: i32) -> (i32, i32) {
    %c0_i32 = arith.constant 0 : i32
    %c0_i32_0 = arith.constant 0 : i32
    %c0_i32_1 = arith.constant 0 : i32
    return %c0_i32, %c0_i32_0 : i32, i32
  }
  func.func @transform_9(%arg0: i32, %arg1: i32) -> (i32, i32, i32) {
    %c0_i32 = arith.constant 0 : i32
    %c0_i32_0 = arith.constant 0 : i32
    %c0_i32_1 = arith.constant 0 : i32
    return %arg0, %c0_i32, %c0_i32_0 : i32, i32, i32
  }
}

</mosaic_0001>

<llo_original>
// kernel: decoder_forward.1
$region0: #{decoder_forward.1}
  #allocation0 [shape = 'u32[]', space=smem, size = 0x4, offset = 0x4, fixed_abs, tag = 'smem constant byte address 0x4 - core index']
  #allocation1 [shape = 'u32[144,128]{1,0:T(1,128)}', space=vmem, size = 0x12000, scoped, tag = 'internal scratch']
  #allocation2 [shape = 'f32[16,32]{1,0:T(8,128)}', space=vmem, size = 0x2000, scoped, tag = 'scratch operand']
  %s0 = inlined_call_operand.vmem [shape: f32[2,8,32], index: 0, kind: input, shape index: {}]
  %s1 = inlined_call_operand.vmem [shape: f32[1,8,32], index: 1, kind: input, shape index: {}]
  %s2 = inlined_call_operand.vmem [shape: bf16[2,32,96], index: 2, kind: input, shape index: {}]
  %s3 = inlined_call_operand.vmem [shape: bf16[2,32,32], index: 3, kind: input, shape index: {}]
  %s4 = inlined_call_operand.vmem [shape: bf16[2,32,64], index: 4, kind: input, shape index: {}]
  %s5 = inlined_call_operand.vmem [shape: bf16[2,64,32], index: 5, kind: input, shape index: {}]
  %s6 = inlined_call_operand.vmem [shape: f32[2,8,128], index: 6, kind: input, shape index: {}]
  %s7 = inlined_call_operand.vmem [shape: bf16[32,128], index: 7, kind: input, shape index: {}]
  %s8 = inlined_call_operand.vmem [shape: f32[1,128], index: 8, kind: input, shape index: {}]
  %s9 = inlined_call_operand.vmem [shape: f32[2,8,128], index: 9, kind: output, shape index: {}]
  %s10 = sld [smem:[#allocation0]]
  $region77: #{decoder_forward.1} parent=0
    _
  %s12 = ssub.s32 1, %s10
  %s13 = scalar_select 0, %s12, %s10
  loop: start=0, step=1, limit=4
  $region2: #{decoder_forward.1} parent=0 // loop_pre_header
    _
  $region3: #{decoder_forward.1} parent=0 // loop_header
    %s15 = sphi 0, %s19
    %p16 = scmp.ge.s32.totalorder %s15, 4
    %s22 = sphi 0, %s34
    %s23 = sphi 0, %s30
    %s24 = sphi 0, %s22
    %s25 = sphi 0, %s23
    %s26 = sphi 0, %s24
    %s27 = sphi 0, %s25
    %s37 = sphi 0, %s39
    %s40 = sphi 0, %s37
    %s41 = sphi 0, %s40
    %s57 = sphi 0, %s41
    %s61 = sphi 0, %s61
    %s63 = sphi 0, %s61
    %s64 = sphi 0, %s63
    %s78 = sphi 0, %s64
    %s82 = sphi 0, %s82
    %s84 = sphi 0, %s82
    %s85 = sphi 0, %s84
    %s99 = sphi 0, %s85
    %s103 = sphi 0, %s103
    %s105 = sphi 0, %s103
    %s106 = sphi 0, %s105
    %s120 = sphi 0, %s106
    %s124 = sphi 0, %s124
    %s126 = sphi 0, %s124
    %s127 = sphi 0, %s126
    %s141 = sphi 0, %s127
    %s145 = sphi 0, %s145
    %s147 = sphi 0, %s145
    %s148 = sphi 0, %s147
    %s162 = sphi 0, %s148
    %s166 = sphi 0, %s166
    %s168 = sphi 0, %s166
    %s169 = sphi 0, %s168
    %s183 = sphi 0, %s169
    %s187 = sphi 0, %s187
    %s189 = sphi 0, %s187
    %s190 = sphi 0, %s189
    %s204 = sphi 0, %s190
    %s208 = sphi 0, %s208
    %s210 = sphi 0, %s208
    %s211 = sphi 0, %s210
    %s225 = sphi 0, %s211
    %s231 = sphi 0, %s233
    %s234 = sphi 0, %s231
    %s235 = sphi 0, %s234
    %s251 = sphi 0, %s235
  $region4: #{decoder_forward.1} parent=0 // loop_header_branch
    %18 = sbr.rel (%p16) target = $region8
  $region5: #{decoder_forward.1} parent=0 // loop_body
    %s20 = ssub.s32 %s15, 1
    %s21 = ssub.s32 %s15, 2
    %s28 = sadd.s32 1, %s23
    %p29 = scmp.ge.s32.totalorder %s28, 2
    %s30 = scalar_select %p29, 0, %s28
    %s31 = sadd.s32 1, %s22
    %s32 = scalar_select %p29, %s31, %s22
    %p33 = scmp.ge.s32.totalorder %s32, 1
    %s34 = scalar_select %p33, 0, %s32
    %s35 = ssub.s32 %s22, %s34
    %p36 = scmp.eq.s32.totalorder %s35, 0
    %s38 = sadd.s32 %s37, 1
    %s39 = scalar_select %p36, %s37, %s38
    %p42 = pneg %p36
    %p43 = scmp.eq.s32.totalorder %s15, 1
    %p44 = por %p42, %p43
    %p45 = scmp.ne.s32.totalorder %s37, %s40
    %p46 = scmp.eq.s32.totalorder %s15, 0
    %p47 = por %p45, %p46
    %p48 = scmp.ne.s32.totalorder %s37, %s40
    %p49 = scmp.eq.s32.totalorder %s20, 1
    %p50 = por %p48, %p49
    %p51 = scmp.ne.s32.totalorder %s40, %s41
    %p52 = scmp.eq.s32.totalorder %s20, 0
    %p53 = por %p51, %p52
    %p54 = scmp.ne.s32.totalorder %s40, %s41
    %p55 = scmp.eq.s32.totalorder %s21, 1
    %p56 = por %p54, %p55
    %p58 = scmp.ne.s32.totalorder %s41, %s57
    %p59 = scmp.eq.s32.totalorder %s21, 0
    %p60 = por %p58, %p59
    %s62 = sadd.s32 %s61, 1
    %p65 = scmp.eq.s32.totalorder %s15, 1
    %p66 = scmp.ne.s32.totalorder %s61, %s63
    %p67 = scmp.eq.s32.totalorder %s15, 0
    %p68 = por %p66, %p67
    %p69 = scmp.ne.s32.totalorder %s61, %s63
    %p70 = scmp.eq.s32.totalorder %s20, 1
    %p71 = por %p69, %p70
    %p72 = scmp.ne.s32.totalorder %s63, %s64
    %p73 = scmp.eq.s32.totalorder %s20, 0
    %p74 = por %p72, %p73
    %p75 = scmp.ne.s32.totalorder %s63, %s64
    %p76 = scmp.eq.s32.totalorder %s21, 1
    %p77 = por %p75, %p76
    %p79 = scmp.ne.s32.totalorder %s64, %s78
    %p80 = scmp.eq.s32.totalorder %s21, 0
    %p81 = por %p79, %p80
    %s83 = sadd.s32 %s82, 1
    %p86 = scmp.eq.s32.totalorder %s15, 1
    %p87 = scmp.ne.s32.totalorder %s82, %s84
    %p88 = scmp.eq.s32.totalorder %s15, 0
    %p89 = por %p87, %p88
    %p90 = scmp.ne.s32.totalorder %s82, %s84
    %p91 = scmp.eq.s32.totalorder %s20, 1
    %p92 = por %p90, %p91
    %p93 = scmp.ne.s32.totalorder %s84, %s85
    %p94 = scmp.eq.s32.totalorder %s20, 0
    %p95 = por %p93, %p94
    %p96 = scmp.ne.s32.totalorder %s84, %s85
    %p97 = scmp.eq.s32.totalorder %s21, 1
    %p98 = por %p96, %p97
    %p100 = scmp.ne.s32.totalorder %s85, %s99
    %p101 = scmp.eq.s32.totalorder %s21, 0
    %p102 = por %p100, %p101
    %s104 = sadd.s32 %s103, 1
    %p107 = scmp.eq.s32.totalorder %s15, 1
    %p108 = scmp.ne.s32.totalorder %s103, %s105
    %p109 = scmp.eq.s32.totalorder %s15, 0
    %p110 = por %p108, %p109
    %p111 = scmp.ne.s32.totalorder %s103, %s105
    %p112 = scmp.eq.s32.totalorder %s20, 1
    %p113 = por %p111, %p112
    %p114 = scmp.ne.s32.totalorder %s105, %s106
    %p115 = scmp.eq.s32.totalorder %s20, 0
    %p116 = por %p114, %p115
    %p117 = scmp.ne.s32.totalorder %s105, %s106
    %p118 = scmp.eq.s32.totalorder %s21, 1
    %p119 = por %p117, %p118
    %p121 = scmp.ne.s32.totalorder %s106, %s120
    %p122 = scmp.eq.s32.totalorder %s21, 0
    %p123 = por %p121, %p122
    %s125 = sadd.s32 %s124, 1
    %p128 = scmp.eq.s32.totalorder %s15, 1
    %p129 = scmp.ne.s32.totalorder %s124, %s126
    %p130 = scmp.eq.s32.totalorder %s15, 0
    %p131 = por %p129, %p130
    %p132 = scmp.ne.s32.totalorder %s124, %s126
    %p133 = scmp.eq.s32.totalorder %s20, 1
    %p134 = por %p132, %p133
    %p135 = scmp.ne.s32.totalorder %s126, %s127
    %p136 = scmp.eq.s32.totalorder %s20, 0
    %p137 = por %p135, %p136
    %p138 = scmp.ne.s32.totalorder %s126, %s127
    %p139 = scmp.eq.s32.totalorder %s21, 1
    %p140 = por %p138, %p139
    %p142 = scmp.ne.s32.totalorder %s127, %s141
    %p143 = scmp.eq.s32.totalorder %s21, 0
    %p144 = por %p142, %p143
    %s146 = sadd.s32 %s145, 1
    %p149 = scmp.eq.s32.totalorder %s15, 1
    %p150 = scmp.ne.s32.totalorder %s145, %s147
    %p151 = scmp.eq.s32.totalorder %s15, 0
    %p152 = por %p150, %p151
    %p153 = scmp.ne.s32.totalorder %s145, %s147
    %p154 = scmp.eq.s32.totalorder %s20, 1
    %p155 = por %p153, %p154
    %p156 = scmp.ne.s32.totalorder %s147, %s148
    %p157 = scmp.eq.s32.totalorder %s20, 0
    %p158 = por %p156, %p157
    %p159 = scmp.ne.s32.totalorder %s147, %s148
    %p160 = scmp.eq.s32.totalorder %s21, 1
    %p161 = por %p159, %p160
    %p163 = scmp.ne.s32.totalorder %s148, %s162
    %p164 = scmp.eq.s32.totalorder %s21, 0
    %p165 = por %p163, %p164
    %s167 = sadd.s32 %s166, 1
    %p170 = scmp.eq.s32.totalorder %s15, 1
    %p171 = scmp.ne.s32.totalorder %s166, %s168
    %p172 = scmp.eq.s32.totalorder %s15, 0
    %p173 = por %p171, %p172
    %p174 = scmp.ne.s32.totalorder %s166, %s168
    %p175 = scmp.eq.s32.totalorder %s20, 1
    %p176 = por %p174, %p175
    %p177 = scmp.ne.s32.totalorder %s168, %s169
    %p178 = scmp.eq.s32.totalorder %s20, 0
    %p179 = por %p177, %p178
    %p180 = scmp.ne.s32.totalorder %s168, %s169
    %p181 = scmp.eq.s32.totalorder %s21, 1
    %p182 = por %p180, %p181
    %p184 = scmp.ne.s32.totalorder %s169, %s183
    %p185 = scmp.eq.s32.totalorder %s21, 0
    %p186 = por %p184, %p185
    %s188 = sadd.s32 %s187, 1
    %p191 = scmp.eq.s32.totalorder %s15, 1
    %p192 = scmp.ne.s32.totalorder %s187, %s189
    %p193 = scmp.eq.s32.totalorder %s15, 0
    %p194 = por %p192, %p193
    %p195 = scmp.ne.s32.totalorder %s187, %s189
    %p196 = scmp.eq.s32.totalorder %s20, 1
    %p197 = por %p195, %p196
    %p198 = scmp.ne.s32.totalorder %s189, %s190
    %p199 = scmp.eq.s32.totalorder %s20, 0
    %p200 = por %p198, %p199
    %p201 = scmp.ne.s32.totalorder %s189, %s190
    %p202 = scmp.eq.s32.totalorder %s21, 1
    %p203 = por %p201, %p202
    %p205 = scmp.ne.s32.totalorder %s190, %s204
    %p206 = scmp.eq.s32.totalorder %s21, 0
    %p207 = por %p205, %p206
    %s209 = sadd.s32 %s208, 1
    %p212 = scmp.eq.s32.totalorder %s15, 1
    %p213 = scmp.ne.s32.totalorder %s208, %s210
    %p214 = scmp.eq.s32.totalorder %s15, 0
    %p215 = por %p213, %p214
    %p216 = scmp.ne.s32.totalorder %s208, %s210
    %p217 = scmp.eq.s32.totalorder %s20, 1
    %p218 = por %p216, %p217
    %p219 = scmp.ne.s32.totalorder %s210, %s211
    %p220 = scmp.eq.s32.totalorder %s20, 0
    %p221 = por %p219, %p220
    %p222 = scmp.ne.s32.totalorder %s210, %s211
    %p223 = scmp.eq.s32.totalorder %s21, 1
    %p224 = por %p222, %p223
    %p226 = scmp.ne.s32.totalorder %s211, %s225
    %p227 = scmp.eq.s32.totalorder %s21, 0
    %p228 = por %p226, %p227
    %s229 = ssub.s32 %s22, %s34
    %p230 = scmp.eq.s32.totalorder %s229, 0
    %s232 = sadd.s32 %s231, 1
    %s233 = scalar_select %p230, %s231, %s232
    %p236 = pneg %p230
    %p237 = scmp.eq.s32.totalorder %s15, 1
    %p238 = por %p236, %p237
    %p239 = scmp.ne.s32.totalorder %s231, %s234
    %p240 = scmp.eq.s32.totalorder %s15, 0
    %p241 = por %p239, %p240
    %p242 = scmp.ne.s32.totalorder %s231, %s234
    %p243 = scmp.eq.s32.totalorder %s20, 1
    %p244 = por %p242, %p243
    %p245 = scmp.ne.s32.totalorder %s234, %s235
    %p246 = scmp.eq.s32.totalorder %s20, 0
    %p247 = por %p245, %p246
    %p248 = scmp.ne.s32.totalorder %s234, %s235
    %p249 = scmp.eq.s32.totalorder %s21, 1
    %p250 = por %p248, %p249
    %p252 = scmp.ne.s32.totalorder %s235, %s251
    %p253 = scmp.eq.s32.totalorder %s21, 0
    %p254 = por %p252, %p253
    %p255 = scmp.le.s32.totalorder 1, %s15
    %p256 = scmp.lt.s32.totalorder %s15, 3
    %p257 = pnand %p255, %p256
    %p258 = pneg %p257
    // Predicated region
    $region9: #{decoder_forward.1} parent=5 // pred_check
      _
    $region10: #{decoder_forward.1} parent=5 // pred_check_branch
      %260 = sbr.rel (%p257) target = $region12
    $region11: #{decoder_forward.1} parent=5 // pred_region
      %s261 = ssub.s32 %s15, 1
      // Predicated region
      $region13: #{decoder_forward.1} parent=11 // pred_check
        %p262 = pneg %p53
      $region14: #{decoder_forward.1} parent=11 // pred_check_branch
        %264 = sbr.rel (%p262) target = $region16
      $region15: #{decoder_forward.1} parent=11 // pred_region
        %s265 = smul.u32 2, %s24
        %p266 = scmp.lt.s32.totalorder %s265, 1
        %s267 = scalar_select %p266, %s265, 1
        %s268 = smul.addr %s267, 8
        %s269 = scalar_lea.vmem %s0, %s268
        %s270 = smul.u32 2, %s24
      $region16: #{decoder_forward.1} parent=11 // pred_fallthru
        _
      // Predicated region
      $region17: #{decoder_forward.1} parent=11 // pred_check
        %p271 = pneg %p74
      $region18: #{decoder_forward.1} parent=11 // pred_check_branch
        %273 = sbr.rel (%p271) target = $region20
      $region19: #{decoder_forward.1} parent=11 // pred_region
        _
      $region20: #{decoder_forward.1} parent=11 // pred_fallthru
        _
      // Predicated region
      $region21: #{decoder_forward.1} parent=11 // pred_check
        %p274 = pneg %p95
      $region22: #{decoder_forward.1} parent=11 // pred_check_branch
        %276 = sbr.rel (%p274) target = $region24
      $region23: #{decoder_forward.1} parent=11 // pred_region
        _
      $region24: #{decoder_forward.1} parent=11 // pred_fallthru
        _
      // Predicated region
      $region25: #{decoder_forward.1} parent=11 // pred_check
        %p277 = pneg %p116
      $region26: #{decoder_forward.1} parent=11 // pred_check_branch
        %279 = sbr.rel (%p277) target = $region28
      $region27: #{decoder_forward.1} parent=11 // pred_region
        _
      $region28: #{decoder_forward.1} parent=11 // pred_fallthru
        _
      // Predicated region
      $region29: #{decoder_forward.1} parent=11 // pred_check
        %p280 = pneg %p137
      $region30: #{decoder_forward.1} parent=11 // pred_check_branch
        %282 = sbr.rel (%p280) target = $region32
      $region31: #{decoder_forward.1} parent=11 // pred_region
        _
      $region32: #{decoder_forward.1} parent=11 // pred_fallthru
        _
      // Predicated region
      $region33: #{decoder_forward.1} parent=11 // pred_check
        %p283 = pneg %p158
      $region34: #{decoder_forward.1} parent=11 // pred_check_branch
        %285 = sbr.rel (%p283) target = $region36
      $region35: #{decoder_forward.1} parent=11 // pred_region
        _
      $region36: #{decoder_forward.1} parent=11 // pred_fallthru
        _
      // Predicated region
      $region37: #{decoder_forward.1} parent=11 // pred_check
        %p286 = pneg %p179
      $region38: #{decoder_forward.1} parent=11 // pred_check_branch
        %288 = sbr.rel (%p286) target = $region40
      $region39: #{decoder_forward.1} parent=11 // pred_region
        _
      $region40: #{decoder_forward.1} parent=11 // pred_fallthru
        _
      // Predicated region
      $region41: #{decoder_forward.1} parent=11 // pred_check
        %p289 = pneg %p200
      $region42: #{decoder_forward.1} parent=11 // pred_check_branch
        %291 = sbr.rel (%p289) target = $region44
      $region43: #{decoder_forward.1} parent=11 // pred_region
        _
      $region44: #{decoder_forward.1} parent=11 // pred_fallthru
        _
      // Predicated region
      $region45: #{decoder_forward.1} parent=11 // pred_check
        %p292 = pneg %p221
      $region46: #{decoder_forward.1} parent=11 // pred_check_branch
        %294 = sbr.rel (%p292) target = $region48
      $region47: #{decoder_forward.1} parent=11 // pred_region
        _
      $region48: #{decoder_forward.1} parent=11 // pred_fallthru
        _
    $region12: #{decoder_forward.1} parent=5 // pred_fallthru
      _
    %p295 = scmp.lt.s32.totalorder %s15, 2
    // Predicated region
    $region49: #{decoder_forward.1} parent=5 // pred_check
      %p296 = pneg %p295
    $region50: #{decoder_forward.1} parent=5 // pred_check_branch
      %298 = sbr.rel (%p296) target = $region52
    $region51: #{decoder_forward.1} parent=5 // pred_region
      _
    $region52: #{decoder_forward.1} parent=5 // pred_fallthru
      _
    %p299 = scmp.le.s32.totalorder 1, %s15
    %p300 = scmp.lt.s32.totalorder %s15, 3
    %p301 = pnand %p299, %p300
    %p302 = pneg %p301
    // Predicated region
    $region53: #{decoder_forward.1} parent=5 // pred_check
      _
    $region54: #{decoder_forward.1} parent=5 // pred_check_branch
      %304 = sbr.rel (%p301) target = $region56
    $region55: #{decoder_forward.1} parent=5 // pred_region
      %s305 = ssub.s32 %s15, 1
      %s306 = smul.u32 2, %s24
      %p307 = scmp.lt.s32.totalorder %s306, 1
      %s308 = scalar_select %p307, %s306, 1
      %s309 = smul.addr %s308, 8
      %s310 = scalar_lea.vmem %s0, %s309
      %p311 = pneg %p53
      %p312 = pneg %p50
      %p313 = pneg %p74
      %p314 = pneg %p71
      %p315 = pneg %p95
      %p316 = pneg %p92
      %p317 = pneg %p116
      %p318 = pneg %p113
      %p319 = pneg %p137
      %p320 = pneg %p134
      %p321 = pneg %p158
      %p322 = pneg %p155
      %p323 = pneg %p179
      %p324 = pneg %p176
      %p325 = pneg %p200
      %p326 = pneg %p197
      %p327 = pneg %p221
      %p328 = pneg %p218
      %p329 = pneg %p247
      %p330 = pneg %p244
      %s331 = smul.u32 2, %s24
      %p332 = scmp.lt.s32.totalorder %s331, 1
      %s333 = scalar_select %p332, %s331, 1
      %s334 = smul.addr %s333, 8
      %s335 = scalar_lea.vmem %s9, %s334
      %s336 = smul.u32 2, %s24
      %p337 = scmp.lt.s32.totalorder %s336, 1
      %s338 = scalar_select %p337, %s336, 1
      %s339 = smul.addr %s338, 8
      %s340 = scalar_lea.vmem %s0, %s339
      %s341 = smul.u32 2, %s24
      %s342 = smul.u32 2, %s24
      %p343 = scmp.lt.s32.totalorder %s342, 1
      %s344 = scalar_select %p343, %s342, 1
      %s345 = smul.addr %s344, 8
      %s346 = scalar_lea.vmem %s9, %s345
      %s347 = smul.u32 2, %s24
      %p349 = scmp.eq.s32.totalorder %s25, 0
      // Predicated region
      $region57: #{decoder_forward.1} parent=55 // pred_check
        %p350 = pneg %p349
      $region58: #{decoder_forward.1} parent=55 // pred_check_branch
        %352 = sbr.rel (%p350) target = $region60
      $region59: #{decoder_forward.1} parent=55 // pred_region
        %v353 = vld [vmem:[%s340] sm:$0xff]
        %v354 = vld [vmem:[%s340 + $0x8] sm:$0xff]
        %v355 = vld [vmem:[%s1] sm:$0xff]
        %v356 = vadd.f32 %v353, %v355
        %v357 = vadd.f32 %v354, %v355
        %vm358 = vcmask 261120
        %359 = vst.msk [vmem:[#allocation2] sm:$0xff] %vm358, %v356
        %360 = vst.msk [vmem:[#allocation2 + $0x8] sm:$0xff] %vm358, %v357
      $region60: #{decoder_forward.1} parent=55 // pred_fallthru
        _
      %v361 = vld [vmem:[#allocation2] sm:$0xff]
      %v362 = vld [vmem:[#allocation2 + $0x8] sm:$0xff]
      %s363 = smul.u32 %s25, 4
      %s364 = smul.addr %s363, 4
      %s365 = scalar_lea.vmem %s2, %s364
      %v366 = vld [vmem:[%s365] sm:$0xf]
      %v367 = vld [vmem:[%s365 + $0x4] sm:$0xf]
      %v368 = vld [vmem:[%s365 + $0x8] sm:$0xf]
      %v369 = vld [vmem:[%s365 + $0xc] sm:$0xf]
      %s370 = smul.addr %s363, 4
      %s371 = scalar_lea.vmem %s3, %s370
      %v372 = vld [vmem:[%s371] sm:$0xf]
      %v373 = vld [vmem:[%s371 + $0x4] sm:$0xf]
      %v374 = vld [vmem:[%s371 + $0x8] sm:$0xf]
      %v375 = vld [vmem:[%s371 + $0xc] sm:$0xf]
      %s376 = smul.addr %s363, 4
      %s377 = scalar_lea.vmem %s4, %s376
      %v378 = vld [vmem:[%s377] sm:$0xf]
      %v379 = vld [vmem:[%s377 + $0x4] sm:$0xf]
      %v380 = vld [vmem:[%s377 + $0x8] sm:$0xf]
      %v381 = vld [vmem:[%s377 + $0xc] sm:$0xf]
      %s382 = smul.u32 %s25, 8
      %s383 = smul.addr %s382, 4
      %s384 = scalar_lea.vmem %s5, %s383
      %v385 = vld [vmem:[%s384] sm:$0xf]
      %v386 = vld [vmem:[%s384 + $0x4] sm:$0xf]
      %v387 = vld [vmem:[%s384 + $0x8] sm:$0xf]
      %v388 = vld [vmem:[%s384 + $0xc] sm:$0xf]
      %v389 = vld [vmem:[%s384 + $0x10] sm:$0xf]
      %v390 = vld [vmem:[%s384 + $0x14] sm:$0xf]
      %v391 = vld [vmem:[%s384 + $0x18] sm:$0xf]
      %v392 = vld [vmem:[%s384 + $0x1c] sm:$0xf]
      %s393 = scalar_lea.vmem %s6, %s382
      %v394 = vld [vmem:[%s393] sm:$0xff]
      %v395 = vpack.c.bf16 %v362, %v361
      %v396 = vlaneseq
      %v397 = vshrl.u32 %v396, 7
      %v398 = vsub.s32 0, %v397
      %v399 = vrot.slane %v394, %v398
      %v404 = vunpack.c.l.b16 %v366
      %v405 = vunpack.c.l.b16 %v367
      %v406 = vunpack.c.l.b16 %v368
      %v407 = vunpack.c.l.b16 %v369
      %v408 = vpack.c.b16 %v405, %v404
      %v409 = vpack.c.b16 %v407, %v406
      %vm412 = vcmask 261120
      %v414 = vsel %vm412, %v395, 0
      %416 = vmatprep.subr.bf16.mxu0 0
      %417 = vmatpush1.bf16.msra.mxu0 0
      %418 = vmatprep.subr.bf16.mxu0 0
      %419 = vmatpush1.bf16.msra.mxu0 0
      %420 = vmatprep.subr.bf16.mxu0 0
      %421 = vmatpush1.bf16.msra.mxu0 0
      %422 = vmatprep.subr.bf16.mxu0 0
      %423 = vmatpush1.bf16.msra.mxu0 0
      %424 = vmatprep.subr.bf16.mxu0 0
      %425 = vmatpush1.bf16.msra.mxu0 0
      %426 = vmatprep.subr.bf16.mxu0 0
      %427 = vmatpush1.bf16.msra.mxu0 0
      %428 = vmatprep.subr.bf16.mxu0 0
      %429 = vmatpush1.bf16.msra.mxu0 %v409
      %430 = vmatprep.subr.bf16.mxu0 0
      %431 = vmatpush1.bf16.msra.mxu0 %v408
      %432 = vmatprep.subr.bf16.mxu0 0
      %433 = vmatpush2.bf16.msra.mxu0 0
      %434 = vmatprep.subr.bf16.mxu0 0
      %435 = vmatpush2.bf16.msra.mxu0 0
      %436 = vmatprep.subr.bf16.mxu0 0
      %437 = vmatpush2.bf16.msra.mxu0 0
      %438 = vmatprep.subr.bf16.mxu0 0
      %439 = vmatpush2.bf16.msra.mxu0 0
      %440 = vmatprep.subr.bf16.mxu0 0
      %441 = vmatpush2.bf16.msra.mxu0 0
      %442 = vmatprep.subr.bf16.mxu0 0
      %443 = vmatpush2.bf16.msra.mxu0 0
      %444 = vmatprep.subr.bf16.mxu0 0
      %445 = vmatpush2.bf16.msra.mxu0 0
      %446 = vmatprep.subr.bf16.mxu0 0
      %447 = vmatpush2.bf16.msra.mxu0 0
      %448 = vmatprep.mubr.bf16.mxu0 0
      %449 = vmatmul.mubr.bf16.gmra.mxu0 %v414
      %v450 = vpop.f32.mrf.mxu0
      %v451 = vadd.f32 %v399, %v450
      %v452 = vpop.f32.mrf.mxu0
      %v453 = vpop.f32.mrf.mxu0
      %v454 = vadd.f32 %v399, %v453
      %v455 = vpop.f32.mrf.mxu0
      %456 = vdwg.mxu0
      %v457 = vpack.c.bf16 %v451, %v451
      %v458 = vpack.c.bf16 %v454, %v454
      %460 = vrot.lane.b32.xlu0 %v457, 96
      %v461 = vpop.permute.xlu0 %460
      %vm462 = vcmask 64512
      %v464 = vsel %vm462, %v457, 0
      %v467 = vsel %vm462, %v461, 0
      %469 = vmatprep.subr.bf16.mxu0 0
      %470 = vmatpush1.bf16.xpose.msra.mxu0 0
      %471 = vmatprep.subr.bf16.mxu0 0
      %472 = vmatpush1.bf16.xpose.msra.mxu0 0
      %473 = vmatprep.subr.bf16.mxu0 0
      %474 = vmatpush1.bf16.xpose.msra.mxu0 0
      %475 = vmatprep.subr.bf16.mxu0 0
      %476 = vmatpush1.bf16.xpose.msra.mxu0 0
      %477 = vmatprep.subr.bf16.mxu0 0
      %478 = vmatpush1.bf16.xpose.msra.mxu0 0
      %479 = vmatprep.subr.bf16.mxu0 0
      %480 = vmatpush1.bf16.xpose.msra.mxu0 0
      %481 = vmatprep.subr.bf16.mxu0 0
      %482 = vmatpush1.bf16.xpose.msra.mxu0 0
      %483 = vmatprep.subr.bf16.mxu0 0
      %484 = vmatpush1.bf16.xpose.msra.mxu0 %v467
      %485 = vmatprep.subr.bf16.mxu0 0
      %486 = vmatpush2.bf16.xpose.msra.mxu0 0
      %487 = vmatprep.subr.bf16.mxu0 0
      %488 = vmatpush2.bf16.xpose.msra.mxu0 0
      %489 = vmatprep.subr.bf16.mxu0 0
      %490 = vmatpush2.bf16.xpose.msra.mxu0 0
      %491 = vmatprep.subr.bf16.mxu0 0
      %492 = vmatpush2.bf16.xpose.msra.mxu0 0
      %493 = vmatprep.subr.bf16.mxu0 0
      %494 = vmatpush2.bf16.xpose.msra.mxu0 0
      %495 = vmatprep.subr.bf16.mxu0 0
      %496 = vmatpush2.bf16.xpose.msra.mxu0 0
      %497 = vmatprep.subr.bf16.mxu0 0
      %498 = vmatpush2.bf16.xpose.msra.mxu0 0
      %499 = vmatprep.subr.bf16.mxu0 0
      %500 = vmatpush2.bf16.xpose.msra.mxu0 0
      %501 = vmatprep.mubr.bf16.mxu0 0
      %502 = vmatmul.mubr.bf16.gmra.mxu0 %v464
      %v503 = vpop.f32.mrf.mxu0
      %v504 = vadd.f32 0.0, %v503
      %v505 = vpop.f32.mrf.mxu0
      %v506 = vpop.f32.mrf.mxu0
      %v507 = vpop.f32.mrf.mxu0
      %508 = vdwg.mxu0
      %510 = vrot.lane.b32.xlu0 %v458, 96
      %v511 = vpop.permute.xlu0 %510
      %v513 = vsel %vm462, %v458, 0
      %v516 = vsel %vm462, %v511, 0
      %518 = vmatprep.subr.bf16.mxu0 0
      %519 = vmatpush1.bf16.xpose.msra.mxu0 0
      %520 = vmatprep.subr.bf16.mxu0 0
      %521 = vmatpush1.bf16.xpose.msra.mxu0 0
      %522 = vmatprep.subr.bf16.mxu0 0
      %523 = vmatpush1.bf16.xpose.msra.mxu0 0
      %524 = vmatprep.subr.bf16.mxu0 0
      %525 = vmatpush1.bf16.xpose.msra.mxu0 0
      %526 = vmatprep.subr.bf16.mxu0 0
      %527 = vmatpush1.bf16.xpose.msra.mxu0 0
      %528 = vmatprep.subr.bf16.mxu0 0
      %529 = vmatpush1.bf16.xpose.msra.mxu0 0
      %530 = vmatprep.subr.bf16.mxu0 0
      %531 = vmatpush1.bf16.xpose.msra.mxu0 0
      %532 = vmatprep.subr.bf16.mxu0 0
      %533 = vmatpush1.bf16.xpose.msra.mxu0 %v516
      %534 = vmatprep.subr.bf16.mxu0 0
      %535 = vmatpush2.bf16.xpose.msra.mxu0 0
      %536 = vmatprep.subr.bf16.mxu0 0
      %537 = vmatpush2.bf16.xpose.msra.mxu0 0
      %538 = vmatprep.subr.bf16.mxu0 0
      %539 = vmatpush2.bf16.xpose.msra.mxu0 0
      %540 = vmatprep.subr.bf16.mxu0 0
      %541 = vmatpush2.bf16.xpose.msra.mxu0 0
      %542 = vmatprep.subr.bf16.mxu0 0
      %543 = vmatpush2.bf16.xpose.msra.mxu0 0
      %544 = vmatprep.subr.bf16.mxu0 0
      %545 = vmatpush2.bf16.xpose.msra.mxu0 0
      %546 = vmatprep.subr.bf16.mxu0 0
      %547 = vmatpush2.bf16.xpose.msra.mxu0 0
      %548 = vmatprep.subr.bf16.mxu0 0
      %549 = vmatpush2.bf16.xpose.msra.mxu0 0
      %550 = vmatprep.mubr.bf16.mxu0 0
      %551 = vmatmul.mubr.bf16.gmra.mxu0 %v513
      %v552 = vpop.f32.mrf.mxu0
      %v553 = vadd.f32 0.0, %v552
      %v554 = vpop.f32.mrf.mxu0
      %v555 = vpop.f32.mrf.mxu0
      %v556 = vpop.f32.mrf.mxu0
      %557 = vdwg.mxu0
      %v558 = vmul.f32 %v504, 0.35355338
      %v559 = vmul.f32 %v553, 0.35355338
      %v560 = vsel %vm462, %v558, -inf
      %561 = vmax.xlane.f32.xlu0 %v560
      %v562 = vpop.xlane.xlu0 %561
      %v563 = vsel %vm462, %v559, -inf
      %564 = vmax.xlane.f32.xlu0 %v563
      %v565 = vpop.xlane.xlu0 %564
      %v566 = vsub.f32 %v558, %v562
      %v567 = vsub.f32 %v559, %v565
      %v568 = vmul.f32 %v566, 1.442695
      %v569 = vpow.pop %v568
      %v570 = vmul.f32 %v567, 1.442695
      %v571 = vpow.pop %v570
      %v572 = vsel %vm462, %v569, 0.0
      %573 = vadd.xlane.f32.xlu0 %v572
      %v574 = vpop.xlane.xlu0 %573
      %v575 = vsel %vm462, %v571, 0.0
      %576 = vadd.xlane.f32.xlu0 %v575
      %v577 = vpop.xlane.xlu0 %576
      %v578 = vrcp.pop %v574
      %v579 = vmul.f32 %v569, %v578
      %v580 = vrcp.pop %v577
      %v581 = vmul.f32 %v571, %v580
      %v582 = vpack.c.bf16 %v579, %v579
      %v583 = vpack.c.bf16 %v581, %v581
      %584 = vrot.lane.b32.xlu0 %v457, 64
      %v585 = vpop.permute.xlu0 %584
      %v587 = vsel %vm462, %v582, 0
      %vm589 = vcmask 1043456
      %v591 = vsel %vm589, %v585, 0
      %593 = vmatprep.subr.bf16.mxu0 0
      %594 = vmatpush1.bf16.msra.mxu0 0
      %595 = vmatprep.subr.bf16.mxu0 0
      %596 = vmatpush1.bf16.msra.mxu0 0
      %597 = vmatprep.subr.bf16.mxu0 0
      %598 = vmatpush1.bf16.msra.mxu0 0
      %599 = vmatprep.subr.bf16.mxu0 0
      %600 = vmatpush1.bf16.msra.mxu0 0
      %601 = vmatprep.subr.bf16.mxu0 0
      %602 = vmatpush1.bf16.msra.mxu0 0
      %603 = vmatprep.subr.bf16.mxu0 0
      %604 = vmatpush1.bf16.msra.mxu0 0
      %605 = vmatprep.subr.bf16.mxu0 0
      %606 = vmatpush1.bf16.msra.mxu0 0
      %607 = vmatprep.subr.bf16.mxu0 0
      %608 = vmatpush1.bf16.msra.mxu0 %v591
      %609 = vmatprep.subr.bf16.mxu0 0
      %610 = vmatpush2.bf16.msra.mxu0 0
      %611 = vmatprep.subr.bf16.mxu0 0
      %612 = vmatpush2.bf16.msra.mxu0 0
      %613 = vmatprep.subr.bf16.mxu0 0
      %614 = vmatpush2.bf16.msra.mxu0 0
      %615 = vmatprep.subr.bf16.mxu0 0
      %616 = vmatpush2.bf16.msra.mxu0 0
      %617 = vmatprep.subr.bf16.mxu0 0
      %618 = vmatpush2.bf16.msra.mxu0 0
      %619 = vmatprep.subr.bf16.mxu0 0
      %620 = vmatpush2.bf16.msra.mxu0 0
      %621 = vmatprep.subr.bf16.mxu0 0
      %622 = vmatpush2.bf16.msra.mxu0 0
      %623 = vmatprep.subr.bf16.mxu0 0
      %624 = vmatpush2.bf16.msra.mxu0 0
      %625 = vmatprep.mubr.bf16.mxu0 0
      %626 = vmatmul.mubr.bf16.gmra.mxu0 %v587
      %v627 = vpop.f32.mrf.mxu0
      %v628 = vadd.f32 0.0, %v627
      %v629 = vpop.f32.mrf.mxu0
      %v630 = vpop.f32.mrf.mxu0
      %v631 = vpop.f32.mrf.mxu0
      %632 = vdwg.mxu0
      %633 = vrot.lane.b32.xlu0 %v458, 64
      %v634 = vpop.permute.xlu0 %633
      %v636 = vsel %vm462, %v583, 0
      %v639 = vsel %vm589, %v634, 0
      %641 = vmatprep.subr.bf16.mxu0 0
      %642 = vmatpush1.bf16.msra.mxu0 0
      %643 = vmatprep.subr.bf16.mxu0 0
      %644 = vmatpush1.bf16.msra.mxu0 0
      %645 = vmatprep.subr.bf16.mxu0 0
      %646 = vmatpush1.bf16.msra.mxu0 0
      %647 = vmatprep.subr.bf16.mxu0 0
      %648 = vmatpush1.bf16.msra.mxu0 0
      %649 = vmatprep.subr.bf16.mxu0 0
      %650 = vmatpush1.bf16.msra.mxu0 0
      %651 = vmatprep.subr.bf16.mxu0 0
      %652 = vmatpush1.bf16.msra.mxu0 0
      %653 = vmatprep.subr.bf16.mxu0 0
      %654 = vmatpush1.bf16.msra.mxu0 0
      %655 = vmatprep.subr.bf16.mxu0 0
      %656 = vmatpush1.bf16.msra.mxu0 %v639
      %657 = vmatprep.subr.bf16.mxu0 0
      %658 = vmatpush2.bf16.msra.mxu0 0
      %659 = vmatprep.subr.bf16.mxu0 0
      %660 = vmatpush2.bf16.msra.mxu0 0
      %661 = vmatprep.subr.bf16.mxu0 0
      %662 = vmatpush2.bf16.msra.mxu0 0
      %663 = vmatprep.subr.bf16.mxu0 0
      %664 = vmatpush2.bf16.msra.mxu0 0
      %665 = vmatprep.subr.bf16.mxu0 0
      %666 = vmatpush2.bf16.msra.mxu0 0
      %667 = vmatprep.subr.bf16.mxu0 0
      %668 = vmatpush2.bf16.msra.mxu0 0
      %669 = vmatprep.subr.bf16.mxu0 0
      %670 = vmatpush2.bf16.msra.mxu0 0
      %671 = vmatprep.subr.bf16.mxu0 0
      %672 = vmatpush2.bf16.msra.mxu0 0
      %673 = vmatprep.mubr.bf16.mxu0 0
      %674 = vmatmul.mubr.bf16.gmra.mxu0 %v636
      %v675 = vpop.f32.mrf.mxu0
      %v676 = vadd.f32 0.0, %v675
      %v677 = vpop.f32.mrf.mxu0
      %v678 = vpop.f32.mrf.mxu0
      %v679 = vpop.f32.mrf.mxu0
      %680 = vdwg.mxu0
      %v681 = vpack.c.bf16 %v676, %v628
      %v683 = vsel %vm462, %v681, 0
      %v686 = vsel %vm589, %v372, 0
      %688 = vmatprep.subr.bf16.mxu0 0
      %689 = vmatpush1.bf16.msra.mxu0 0
      %690 = vmatprep.subr.bf16.mxu0 0
      %691 = vmatpush1.bf16.msra.mxu0 0
      %692 = vmatprep.subr.bf16.mxu0 0
      %693 = vmatpush1.bf16.msra.mxu0 0
      %694 = vmatprep.subr.bf16.mxu0 0
      %695 = vmatpush1.bf16.msra.mxu0 0
      %696 = vmatprep.subr.bf16.mxu0 0
      %697 = vmatpush1.bf16.msra.mxu0 0
      %698 = vmatprep.subr.bf16.mxu0 0
      %699 = vmatpush1.bf16.msra.mxu0 0
      %700 = vmatprep.subr.bf16.mxu0 0
      %701 = vmatpush1.bf16.msra.mxu0 0
      %702 = vmatprep.subr.bf16.mxu0 0
      %703 = vmatpush1.bf16.msra.mxu0 %v686
      %704 = vmatprep.subr.bf16.mxu0 0
      %705 = vmatpush2.bf16.msra.mxu0 0
      %706 = vmatprep.subr.bf16.mxu0 0
      %707 = vmatpush2.bf16.msra.mxu0 0
      %708 = vmatprep.subr.bf16.mxu0 0
      %709 = vmatpush2.bf16.msra.mxu0 0
      %710 = vmatprep.subr.bf16.mxu0 0
      %711 = vmatpush2.bf16.msra.mxu0 0
      %712 = vmatprep.subr.bf16.mxu0 0
      %713 = vmatpush2.bf16.msra.mxu0 0
      %714 = vmatprep.subr.bf16.mxu0 0
      %715 = vmatpush2.bf16.msra.mxu0 0
      %716 = vmatprep.subr.bf16.mxu0 0
      %717 = vmatpush2.bf16.msra.mxu0 0
      %718 = vmatprep.subr.bf16.mxu0 0
      %719 = vmatpush2.bf16.msra.mxu0 0
      %720 = vmatprep.mubr.bf16.mxu0 0
      %721 = vmatmul.mubr.bf16.gmra.mxu0 %v683
      %v722 = vpop.f32.mrf.mxu0
      %v723 = vadd.f32 0.0, %v722
      %v724 = vpop.f32.mrf.mxu0
      %v725 = vpop.f32.mrf.mxu0
      %v726 = vadd.f32 0.0, %v725
      %v727 = vpop.f32.mrf.mxu0
      %728 = vdwg.mxu0
      %v729 = vlaneseq
      %v730 = vshrl.u32 %v729, 7
      %v731 = vsub.s32 1, %v730
      %v732 = vrot.slane %v394, %v731
      %v733 = vadd.f32 %v732, %v723
      %v734 = vadd.f32 %v732, %v726
      %735 = vrot.lane.b32.xlu0 %v457, 120
      %v736 = vpop.permute.xlu0 %735
      %737 = vrot.lane.b32.xlu0 %v457, 88
      %v738 = vpop.permute.xlu0 %737
      %v740 = vsel %vm462, %v736, 0
      %v743 = vsel %vm462, %v738, 0
      %745 = vmatprep.subr.bf16.mxu0 0
      %746 = vmatpush1.bf16.xpose.msra.mxu0 0
      %747 = vmatprep.subr.bf16.mxu0 0
      %748 = vmatpush1.bf16.xpose.msra.mxu0 0
      %749 = vmatprep.subr.bf16.mxu0 0
      %750 = vmatpush1.bf16.xpose.msra.mxu0 0
      %751 = vmatprep.subr.bf16.mxu0 0
      %752 = vmatpush1.bf16.xpose.msra.mxu0 0
      %753 = vmatprep.subr.bf16.mxu0 0
      %754 = vmatpush1.bf16.xpose.msra.mxu0 0
      %755 = vmatprep.subr.bf16.mxu0 0
      %756 = vmatpush1.bf16.xpose.msra.mxu0 0
      %757 = vmatprep.subr.bf16.mxu0 0
      %758 = vmatpush1.bf16.xpose.msra.mxu0 0
      %759 = vmatprep.subr.bf16.mxu0 0
      %760 = vmatpush1.bf16.xpose.msra.mxu0 %v743
      %761 = vmatprep.subr.bf16.mxu0 0
      %762 = vmatpush2.bf16.xpose.msra.mxu0 0
      %763 = vmatprep.subr.bf16.mxu0 0
      %764 = vmatpush2.bf16.xpose.msra.mxu0 0
      %765 = vmatprep.subr.bf16.mxu0 0
      %766 = vmatpush2.bf16.xpose.msra.mxu0 0
      %767 = vmatprep.subr.bf16.mxu0 0
      %768 = vmatpush2.bf16.xpose.msra.mxu0 0
      %769 = vmatprep.subr.bf16.mxu0 0
      %770 = vmatpush2.bf16.xpose.msra.mxu0 0
      %771 = vmatprep.subr.bf16.mxu0 0
      %772 = vmatpush2.bf16.xpose.msra.mxu0 0
      %773 = vmatprep.subr.bf16.mxu0 0
      %774 = vmatpush2.bf16.xpose.msra.mxu0 0
      %775 = vmatprep.subr.bf16.mxu0 0
      %776 = vmatpush2.bf16.xpose.msra.mxu0 0
      %777 = vmatprep.mubr.bf16.mxu0 0
      %778 = vmatmul.mubr.bf16.gmra.mxu0 %v740
      %v779 = vpop.f32.mrf.mxu0
      %v780 = vadd.f32 0.0, %v779
      %v781 = vpop.f32.mrf.mxu0
      %v782 = vpop.f32.mrf.mxu0
      %v783 = vpop.f32.mrf.mxu0
      %784 = vdwg.mxu0
      %785 = vrot.lane.b32.xlu0 %v458, 120
      %v786 = vpop.permute.xlu0 %785
      %787 = vrot.lane.b32.xlu0 %v458, 88
      %v788 = vpop.permute.xlu0 %787
      %v790 = vsel %vm462, %v786, 0
      %v793 = vsel %vm462, %v788, 0
      %795 = vmatprep.subr.bf16.mxu0 0
      %796 = vmatpush1.bf16.xpose.msra.mxu0 0
      %797 = vmatprep.subr.bf16.mxu0 0
      %798 = vmatpush1.bf16.xpose.msra.mxu0 0
      %799 = vmatprep.subr.bf16.mxu0 0
      %800 = vmatpush1.bf16.xpose.msra.mxu0 0
      %801 = vmatprep.subr.bf16.mxu0 0
      %802 = vmatpush1.bf16.xpose.msra.mxu0 0
      %803 = vmatprep.subr.bf16.mxu0 0
      %804 = vmatpush1.bf16.xpose.msra.mxu0 0
      %805 = vmatprep.subr.bf16.mxu0 0
      %806 = vmatpush1.bf16.xpose.msra.mxu0 0
      %807 = vmatprep.subr.bf16.mxu0 0
      %808 = vmatpush1.bf16.xpose.msra.mxu0 0
      %809 = vmatprep.subr.bf16.mxu0 0
      %810 = vmatpush1.bf16.xpose.msra.mxu0 %v793
      %811 = vmatprep.subr.bf16.mxu0 0
      %812 = vmatpush2.bf16.xpose.msra.mxu0 0
      %813 = vmatprep.subr.bf16.mxu0 0
      %814 = vmatpush2.bf16.xpose.msra.mxu0 0
      %815 = vmatprep.subr.bf16.mxu0 0
      %816 = vmatpush2.bf16.xpose.msra.mxu0 0
      %817 = vmatprep.subr.bf16.mxu0 0
      %818 = vmatpush2.bf16.xpose.msra.mxu0 0
      %819 = vmatprep.subr.bf16.mxu0 0
      %820 = vmatpush2.bf16.xpose.msra.mxu0 0
      %821 = vmatprep.subr.bf16.mxu0 0
      %822 = vmatpush2.bf16.xpose.msra.mxu0 0
      %823 = vmatprep.subr.bf16.mxu0 0
      %824 = vmatpush2.bf16.xpose.msra.mxu0 0
      %825 = vmatprep.subr.bf16.mxu0 0
      %826 = vmatpush2.bf16.xpose.msra.mxu0 0
      %827 = vmatprep.mubr.bf16.mxu0 0
      %828 = vmatmul.mubr.bf16.gmra.mxu0 %v790
      %v829 = vpop.f32.mrf.mxu0
      %v830 = vadd.f32 0.0, %v829
      %v831 = vpop.f32.mrf.mxu0
      %v832 = vpop.f32.mrf.mxu0
      %v833 = vpop.f32.mrf.mxu0
      %834 = vdwg.mxu0
      %v835 = vmul.f32 %v780, 0.35355338
      %v836 = vmul.f32 %v830, 0.35355338
      %v837 = vsel %vm462, %v835, -inf
      %838 = vmax.xlane.f32.xlu0 %v837
      %v839 = vpop.xlane.xlu0 %838
      %v840 = vsel %vm462, %v836, -inf
      %841 = vmax.xlane.f32.xlu0 %v840
      %v842 = vpop.xlane.xlu0 %841
      %v843 = vsub.f32 %v835, %v839
      %v844 = vsub.f32 %v836, %v842
      %v845 = vmul.f32 %v843, 1.442695
      %v846 = vpow.pop %v845
      %v847 = vmul.f32 %v844, 1.442695
      %v848 = vpow.pop %v847
      %v849 = vsel %vm462, %v846, 0.0
      %850 = vadd.xlane.f32.xlu0 %v849
      %v851 = vpop.xlane.xlu0 %850
      %v852 = vsel %vm462, %v848, 0.0
      %853 = vadd.xlane.f32.xlu0 %v852
      %v854 = vpop.xlane.xlu0 %853
      %v855 = vrcp.pop %v851
      %v856 = vmul.f32 %v846, %v855
      %v857 = vrcp.pop %v854
      %v858 = vmul.f32 %v848, %v857
      %v859 = vpack.c.bf16 %v856, %v856
      %v860 = vpack.c.bf16 %v858, %v858
      %861 = vrot.lane.b32.xlu0 %v457, 56
      %v862 = vpop.permute.xlu0 %861
      %v864 = vsel %vm462, %v859, 0
      %v867 = vsel %vm589, %v862, 0
      %869 = vmatprep.subr.bf16.mxu0 0
      %870 = vmatpush1.bf16.msra.mxu0 0
      %871 = vmatprep.subr.bf16.mxu0 0
      %872 = vmatpush1.bf16.msra.mxu0 0
      %873 = vmatprep.subr.bf16.mxu0 0
      %874 = vmatpush1.bf16.msra.mxu0 0
      %875 = vmatprep.subr.bf16.mxu0 0
      %876 = vmatpush1.bf16.msra.mxu0 0
      %877 = vmatprep.subr.bf16.mxu0 0
      %878 = vmatpush1.bf16.msra.mxu0 0
      %879 = vmatprep.subr.bf16.mxu0 0
      %880 = vmatpush1.bf16.msra.mxu0 0
      %881 = vmatprep.subr.bf16.mxu0 0
      %882 = vmatpush1.bf16.msra.mxu0 0
      %883 = vmatprep.subr.bf16.mxu0 0
      %884 = vmatpush1.bf16.msra.mxu0 %v867
      %885 = vmatprep.subr.bf16.mxu0 0
      %886 = vmatpush2.bf16.msra.mxu0 0
      %887 = vmatprep.subr.bf16.mxu0 0
      %888 = vmatpush2.bf16.msra.mxu0 0
      %889 = vmatprep.subr.bf16.mxu0 0
      %890 = vmatpush2.bf16.msra.mxu0 0
      %891 = vmatprep.subr.bf16.mxu0 0
      %892 = vmatpush2.bf16.msra.mxu0 0
      %893 = vmatprep.subr.bf16.mxu0 0
      %894 = vmatpush2.bf16.msra.mxu0 0
      %895 = vmatprep.subr.bf16.mxu0 0
      %896 = vmatpush2.bf16.msra.mxu0 0
      %897 = vmatprep.subr.bf16.mxu0 0
      %898 = vmatpush2.bf16.msra.mxu0 0
      %899 = vmatprep.subr.bf16.mxu0 0
      %900 = vmatpush2.bf16.msra.mxu0 0
      %901 = vmatprep.mubr.bf16.mxu0 0
      %902 = vmatmul.mubr.bf16.gmra.mxu0 %v864
      %v903 = vpop.f32.mrf.mxu0
      %v904 = vadd.f32 0.0, %v903
      %v905 = vpop.f32.mrf.mxu0
      %v906 = vpop.f32.mrf.mxu0
      %v907 = vpop.f32.mrf.mxu0
      %908 = vdwg.mxu0
      %909 = vrot.lane.b32.xlu0 %v458, 56
      %v910 = vpop.permute.xlu0 %909
      %v912 = vsel %vm462, %v860, 0
      %v915 = vsel %vm589, %v910, 0
      %917 = vmatprep.subr.bf16.mxu0 0
      %918 = vmatpush1.bf16.msra.mxu0 0
      %919 = vmatprep.subr.bf16.mxu0 0
      %920 = vmatpush1.bf16.msra.mxu0 0
      %921 = vmatprep.subr.bf16.mxu0 0
      %922 = vmatpush1.bf16.msra.mxu0 0
      %923 = vmatprep.subr.bf16.mxu0 0
      %924 = vmatpush1.bf16.msra.mxu0 0
      %925 = vmatprep.subr.bf16.mxu0 0
      %926 = vmatpush1.bf16.msra.mxu0 0
      %927 = vmatprep.subr.bf16.mxu0 0
      %928 = vmatpush1.bf16.msra.mxu0 0
      %929 = vmatprep.subr.bf16.mxu0 0
      %930 = vmatpush1.bf16.msra.mxu0 0
      %931 = vmatprep.subr.bf16.mxu0 0
      %932 = vmatpush1.bf16.msra.mxu0 %v915
      %933 = vmatprep.subr.bf16.mxu0 0
      %934 = vmatpush2.bf16.msra.mxu0 0
      %935 = vmatprep.subr.bf16.mxu0 0
      %936 = vmatpush2.bf16.msra.mxu0 0
      %937 = vmatprep.subr.bf16.mxu0 0
      %938 = vmatpush2.bf16.msra.mxu0 0
      %939 = vmatprep.subr.bf16.mxu0 0
      %940 = vmatpush2.bf16.msra.mxu0 0
      %941 = vmatprep.subr.bf16.mxu0 0
      %942 = vmatpush2.bf16.msra.mxu0 0
      %943 = vmatprep.subr.bf16.mxu0 0
      %944 = vmatpush2.bf16.msra.mxu0 0
      %945 = vmatprep.subr.bf16.mxu0 0
      %946 = vmatpush2.bf16.msra.mxu0 0
      %947 = vmatprep.subr.bf16.mxu0 0
      %948 = vmatpush2.bf16.msra.mxu0 0
      %949 = vmatprep.mubr.bf16.mxu0 0
      %950 = vmatmul.mubr.bf16.gmra.mxu0 %v912
      %v951 = vpop.f32.mrf.mxu0
      %v952 = vadd.f32 0.0, %v951
      %v953 = vpop.f32.mrf.mxu0
      %v954 = vpop.f32.mrf.mxu0
      %v955 = vpop.f32.mrf.mxu0
      %956 = vdwg.mxu0
      %v957 = vpack.c.bf16 %v952, %v904
      %v959 = vsel %vm462, %v957, 0
      %v962 = vsel %vm589, %v373, 0
      %964 = vmatprep.subr.bf16.mxu0 0
      %965 = vmatpush1.bf16.msra.mxu0 0
      %966 = vmatprep.subr.bf16.mxu0 0
      %967 = vmatpush1.bf16.msra.mxu0 0
      %968 = vmatprep.subr.bf16.mxu0 0
      %969 = vmatpush1.bf16.msra.mxu0 0
      %970 = vmatprep.subr.bf16.mxu0 0
      %971 = vmatpush1.bf16.msra.mxu0 0
      %972 = vmatprep.subr.bf16.mxu0 0
      %973 = vmatpush1.bf16.msra.mxu0 0
      %974 = vmatprep.subr.bf16.mxu0 0
      %975 = vmatpush1.bf16.msra.mxu0 0
      %976 = vmatprep.subr.bf16.mxu0 0
      %977 = vmatpush1.bf16.msra.mxu0 0
      %978 = vmatprep.subr.bf16.mxu0 0
      %979 = vmatpush1.bf16.msra.mxu0 %v962
      %980 = vmatprep.subr.bf16.mxu0 0
      %981 = vmatpush2.bf16.msra.mxu0 0
      %982 = vmatprep.subr.bf16.mxu0 0
      %983 = vmatpush2.bf16.msra.mxu0 0
      %984 = vmatprep.subr.bf16.mxu0 0
      %985 = vmatpush2.bf16.msra.mxu0 0
      %986 = vmatprep.subr.bf16.mxu0 0
      %987 = vmatpush2.bf16.msra.mxu0 0
      %988 = vmatprep.subr.bf16.mxu0 0
      %989 = vmatpush2.bf16.msra.mxu0 0
      %990 = vmatprep.subr.bf16.mxu0 0
      %991 = vmatpush2.bf16.msra.mxu0 0
      %992 = vmatprep.subr.bf16.mxu0 0
      %993 = vmatpush2.bf16.msra.mxu0 0
      %994 = vmatprep.subr.bf16.mxu0 0
      %995 = vmatpush2.bf16.msra.mxu0 0
      %996 = vmatprep.mubr.bf16.mxu0 0
      %997 = vmatmul.mubr.bf16.gmra.mxu0 %v959
      %v998 = vpop.f32.mrf.mxu0
      %v999 = vadd.f32 0.0, %v998
      %v1000 = vpop.f32.mrf.mxu0
      %v1001 = vpop.f32.mrf.mxu0
      %v1002 = vadd.f32 0.0, %v1001
      %v1003 = vpop.f32.mrf.mxu0
      %1004 = vdwg.mxu0
      %v1005 = vadd.f32 %v733, %v999
      %v1006 = vadd.f32 %v734, %v1002
      %1007 = vrot.lane.b32.xlu0 %v457, 112
      %v1008 = vpop.permute.xlu0 %1007
      %1009 = vrot.lane.b32.xlu0 %v457, 80
      %v1010 = vpop.permute.xlu0 %1009
      %v1012 = vsel %vm462, %v1008, 0
      %v1015 = vsel %vm462, %v1010, 0
      %1017 = vmatprep.subr.bf16.mxu0 0
      %1018 = vmatpush1.bf16.xpose.msra.mxu0 0
      %1019 = vmatprep.subr.bf16.mxu0 0
      %1020 = vmatpush1.bf16.xpose.msra.mxu0 0
      %1021 = vmatprep.subr.bf16.mxu0 0
      %1022 = vmatpush1.bf16.xpose.msra.mxu0 0
      %1023 = vmatprep.subr.bf16.mxu0 0
      %1024 = vmatpush1.bf16.xpose.msra.mxu0 0
      %1025 = vmatprep.subr.bf16.mxu0 0
      %1026 = vmatpush1.bf16.xpose.msra.mxu0 0
      %1027 = vmatprep.subr.bf16.mxu0 0
      %1028 = vmatpush1.bf16.xpose.msra.mxu0 0
      %1029 = vmatprep.subr.bf16.mxu0 0
      %1030 = vmatpush1.bf16.xpose.msra.mxu0 0
      %1031 = vmatprep.subr.bf16.mxu0 0
      %1032 = vmatpush1.bf16.xpose.msra.mxu0 %v1015
      %1033 = vmatprep.subr.bf16.mxu0 0
      %1034 = vmatpush2.bf16.xpose.msra.mxu0 0
      %1035 = vmatprep.subr.bf16.mxu0 0
      %1036 = vmatpush2.bf16.xpose.msra.mxu0 0
      %1037 = vmatprep.subr.bf16.mxu0 0
      %1038 = vmatpush2.bf16.xpose.msra.mxu0 0
      %1039 = vmatprep.subr.bf16.mxu0 0
      %1040 = vmatpush2.bf16.xpose.msra.mxu0 0
      %1041 = vmatprep.subr.bf16.mxu0 0
      %1042 = vmatpush2.bf16.xpose.msra.mxu0 0
      %1043 = vmatprep.subr.bf16.mxu0 0
      %1044 = vmatpush2.bf16.xpose.msra.mxu0 0
      %1045 = vmatprep.subr.bf16.mxu0 0
      %1046 = vmatpush2.bf16.xpose.msra.mxu0 0
      %1047 = vmatprep.subr.bf16.mxu0 0
      %1048 = vmatpush2.bf16.xpose.msra.mxu0 0
      %1049 = vmatprep.mubr.bf16.mxu0 0
      %1050 = vmatmul.mubr.bf16.gmra.mxu0 %v1012
      %v1051 = vpop.f32.mrf.mxu0
      %v1052 = vadd.f32 0.0, %v1051
      %v1053 = vpop.f32.mrf.mxu0
      %v1054 = vpop.f32.mrf.mxu0
      %v1055 = vpop.f32.mrf.mxu0
      %1056 = vdwg.mxu0
      %1057 = vrot.lane.b32.xlu0 %v458, 112
      %v1058 = vpop.permute.xlu0 %1057
      %1059 = vrot.lane.b32.xlu0 %v458, 80
      %v1060 = vpop.permute.xlu0 %1059
      %v1062 = vsel %vm462, %v1058, 0
      %v1065 = vsel %vm462, %v1060, 0
      %1067 = vmatprep.subr.bf16.mxu0 0
      %1068 = vmatpush1.bf16.xpose.msra.mxu0 0
      %1069 = vmatprep.subr.bf16.mxu0 0
      %1070 = vmatpush1.bf16.xpose.msra.mxu0 0
      %1071 = vmatprep.subr.bf16.mxu0 0
      %1072 = vmatpush1.bf16.xpose.msra.mxu0 0
      %1073 = vmatprep.subr.bf16.mxu0 0
      %1074 = vmatpush1.bf16.xpose.msra.mxu0 0
      %1075 = vmatprep.subr.bf16.mxu0 0
      %1076 = vmatpush1.bf16.xpose.msra.mxu0 0
      %1077 = vmatprep.subr.bf16.mxu0 0
      %1078 = vmatpush1.bf16.xpose.msra.mxu0 0
      %1079 = vmatprep.subr.bf16.mxu0 0
      %1080 = vmatpush1.bf16.xpose.msra.mxu0 0
      %1081 = vmatprep.subr.bf16.mxu0 0
      %1082 = vmatpush1.bf16.xpose.msra.mxu0 %v1065
      %1083 = vmatprep.subr.bf16.mxu0 0
      %1084 = vmatpush2.bf16.xpose.msra.mxu0 0
      %1085 = vmatprep.subr.bf16.mxu0 0
      %1086 = vmatpush2.bf16.xpose.msra.mxu0 0
      %1087 = vmatprep.subr.bf16.mxu0 0
      %1088 = vmatpush2.bf16.xpose.msra.mxu0 0
      %1089 = vmatprep.subr.bf16.mxu0 0
      %1090 = vmatpush2.bf16.xpose.msra.mxu0 0
      %1091 = vmatprep.subr.bf16.mxu0 0
      %1092 = vmatpush2.bf16.xpose.msra.mxu0 0
      %1093 = vmatprep.subr.bf16.mxu0 0
      %1094 = vmatpush2.bf16.xpose.msra.mxu0 0
      %1095 = vmatprep.subr.bf16.mxu0 0
      %1096 = vmatpush2.bf16.xpose.msra.mxu0 0
      %1097 = vmatprep.subr.bf16.mxu0 0
      %1098 = vmatpush2.bf16.xpose.msra.mxu0 0
      %1099 = vmatprep.mubr.bf16.mxu0 0
      %1100 = vmatmul.mubr.bf16.gmra.mxu0 %v1062
      %v1101 = vpop.f32.mrf.mxu0
      %v1102 = vadd.f32 0.0, %v1101
      %v1103 = vpop.f32.mrf.mxu0
      %v1104 = vpop.f32.mrf.mxu0
      %v1105 = vpop.f32.mrf.mxu0
      %1106 = vdwg.mxu0
      %v1107 = vmul.f32 %v1052, 0.35355338
      %v1108 = vmul.f32 %v1102, 0.35355338
      %v1109 = vsel %vm462, %v1107, -inf
      %1110 = vmax.xlane.f32.xlu0 %v1109
      %v1111 = vpop.xlane.xlu0 %1110
      %v1112 = vsel %vm462, %v1108, -inf
      %1113 = vmax.xlane.f32.xlu0 %v1112
      %v1114 = vpop.xlane.xlu0 %1113
      %v1115 = vsub.f32 %v1107, %v1111
      %v1116 = vsub.f32 %v1108, %v1114
      %v1117 = vmul.f32 %v1115, 1.442695
      %v1118 = vpow.pop %v1117
      %v1119 = vmul.f32 %v1116, 1.442695
      %v1120 = vpow.pop %v1119
      %v1121 = vsel %vm462, %v1118, 0.0
      %1122 = vadd.xlane.f32.xlu0 %v1121
      %v1123 = vpop.xlane.xlu0 %1122
      %v1124 = vsel %vm462, %v1120, 0.0
      %1125 = vadd.xlane.f32.xlu0 %v1124
      %v1126 = vpop.xlane.xlu0 %1125
      %v1127 = vrcp.pop %v1123
      %v1128 = vmul.f32 %v1118, %v1127
      %v1129 = vrcp.pop %v1126
      %v1130 = vmul.f32 %v1120, %v1129
      %v1131 = vpack.c.bf16 %v1128, %v1128
      %v1132 = vpack.c.bf16 %v1130, %v1130
      %1133 = vrot.lane.b32.xlu0 %v457, 48
      %v1134 = vpop.permute.xlu0 %1133
      %v1136 = vsel %vm462, %v1131, 0
      %v1139 = vsel %vm589, %v1134, 0
      %1141 = vmatprep.subr.bf16.mxu0 0
      %1142 = vmatpush1.bf16.msra.mxu0 0
      %1143 = vmatprep.subr.bf16.mxu0 0
      %1144 = vmatpush1.bf16.msra.mxu0 0
      %1145 = vmatprep.subr.bf16.mxu0 0
      %1146 = vmatpush1.bf16.msra.mxu0 0
      %1147 = vmatprep.subr.bf16.mxu0 0
      %1148 = vmatpush1.bf16.msra.mxu0 0
      %1149 = vmatprep.subr.bf16.mxu0 0
      %1150 = vmatpush1.bf16.msra.mxu0 0
      %1151 = vmatprep.subr.bf16.mxu0 0
      %1152 = vmatpush1.bf16.msra.mxu0 0
      %1153 = vmatprep.subr.bf16.mxu0 0
      %1154 = vmatpush1.bf16.msra.mxu0 0
      %1155 = vmatprep.subr.bf16.mxu0 0
      %1156 = vmatpush1.bf16.msra.mxu0 %v1139
      %1157 = vmatprep.subr.bf16.mxu0 0
      %1158 = vmatpush2.bf16.msra.mxu0 0
      %1159 = vmatprep.subr.bf16.mxu0 0
      %1160 = vmatpush2.bf16.msra.mxu0 0
      %1161 = vmatprep.subr.bf16.mxu0 0
      %1162 = vmatpush2.bf16.msra.mxu0 0
      %1163 = vmatprep.subr.bf16.mxu0 0
      %1164 = vmatpush2.bf16.msra.mxu0 0
      %1165 = vmatprep.subr.bf16.mxu0 0
      %1166 = vmatpush2.bf16.msra.mxu0 0
      %1167 = vmatprep.subr.bf16.mxu0 0
      %1168 = vmatpush2.bf16.msra.mxu0 0
      %1169 = vmatprep.subr.bf16.mxu0 0
      %1170 = vmatpush2.bf16.msra.mxu0 0
      %1171 = vmatprep.subr.bf16.mxu0 0
      %1172 = vmatpush2.bf16.msra.mxu0 0
      %1173 = vmatprep.mubr.bf16.mxu0 0
      %1174 = vmatmul.mubr.bf16.gmra.mxu0 %v1136
      %v1175 = vpop.f32.mrf.mxu0
      %v1176 = vadd.f32 0.0, %v1175
      %v1177 = vpop.f32.mrf.mxu0
      %v1178 = vpop.f32.mrf.mxu0
      %v1179 = vpop.f32.mrf.mxu0
      %1180 = vdwg.mxu0
      %1181 = vrot.lane.b32.xlu0 %v458, 48
      %v1182 = vpop.permute.xlu0 %1181
      %v1184 = vsel %vm462, %v1132, 0
      %v1187 = vsel %vm589, %v1182, 0
      %1189 = vmatprep.subr.bf16.mxu0 0
      %1190 = vmatpush1.bf16.msra.mxu0 0
      %1191 = vmatprep.subr.bf16.mxu0 0
      %1192 = vmatpush1.bf16.msra.mxu0 0
      %1193 = vmatprep.subr.bf16.mxu0 0
      %1194 = vmatpush1.bf16.msra.mxu0 0
      %1195 = vmatprep.subr.bf16.mxu0 0
      %1196 = vmatpush1.bf16.msra.mxu0 0
      %1197 = vmatprep.subr.bf16.mxu0 0
      %1198 = vmatpush1.bf16.msra.mxu0 0
      %1199 = vmatprep.subr.bf16.mxu0 0
      %1200 = vmatpush1.bf16.msra.mxu0 0
      %1201 = vmatprep.subr.bf16.mxu0 0
      %1202 = vmatpush1.bf16.msra.mxu0 0
      %1203 = vmatprep.subr.bf16.mxu0 0
      %1204 = vmatpush1.bf16.msra.mxu0 %v1187
      %1205 = vmatprep.subr.bf16.mxu0 0
      %1206 = vmatpush2.bf16.msra.mxu0 0
      %1207 = vmatprep.subr.bf16.mxu0 0
      %1208 = vmatpush2.bf16.msra.mxu0 0
      %1209 = vmatprep.subr.bf16.mxu0 0
      %1210 = vmatpush2.bf16.msra.mxu0 0
      %1211 = vmatprep.subr.bf16.mxu0 0
      %1212 = vmatpush2.bf16.msra.mxu0 0
      %1213 = vmatprep.subr.bf16.mxu0 0
      %1214 = vmatpush2.bf16.msra.mxu0 0
      %1215 = vmatprep.subr.bf16.mxu0 0
      %1216 = vmatpush2.bf16.msra.mxu0 0
      %1217 = vmatprep.subr.bf16.mxu0 0
      %1218 = vmatpush2.bf16.msra.mxu0 0
      %1219 = vmatprep.subr.bf16.mxu0 0
      %1220 = vmatpush2.bf16.msra.mxu0 0
      %1221 = vmatprep.mubr.bf16.mxu0 0
      %1222 = vmatmul.mubr.bf16.gmra.mxu0 %v1184
      %v1223 = vpop.f32.mrf.mxu0
      %v1224 = vadd.f32 0.0, %v1223
      %v1225 = vpop.f32.mrf.mxu0
      %v1226 = vpop.f32.mrf.mxu0
      %v1227 = vpop.f32.mrf.mxu0
      %1228 = vdwg.mxu0
      %v1229 = vpack.c.bf16 %v1224, %v1176
      %v1231 = vsel %vm462, %v1229, 0
      %v1234 = vsel %vm589, %v374, 0
      %1236 = vmatprep.subr.bf16.mxu0 0
      %1237 = vmatpush1.bf16.msra.mxu0 0
      %1238 = vmatprep.subr.bf16.mxu0 0
      %1239 = vmatpush1.bf16.msra.mxu0 0
      %1240 = vmatprep.subr.bf16.mxu0 0
      %1241 = vmatpush1.bf16.msra.mxu0 0
      %1242 = vmatprep.subr.bf16.mxu0 0
      %1243 = vmatpush1.bf16.msra.mxu0 0
      %1244 = vmatprep.subr.bf16.mxu0 0
      %1245 = vmatpush1.bf16.msra.mxu0 0
      %1246 = vmatprep.subr.bf16.mxu0 0
      %1247 = vmatpush1.bf16.msra.mxu0 0
      %1248 = vmatprep.subr.bf16.mxu0 0
      %1249 = vmatpush1.bf16.msra.mxu0 0
      %1250 = vmatprep.subr.bf16.mxu0 0
      %1251 = vmatpush1.bf16.msra.mxu0 %v1234
      %1252 = vmatprep.subr.bf16.mxu0 0
      %1253 = vmatpush2.bf16.msra.mxu0 0
      %1254 = vmatprep.subr.bf16.mxu0 0
      %1255 = vmatpush2.bf16.msra.mxu0 0
      %1256 = vmatprep.subr.bf16.mxu0 0
      %1257 = vmatpush2.bf16.msra.mxu0 0
      %1258 = vmatprep.subr.bf16.mxu0 0
      %1259 = vmatpush2.bf16.msra.mxu0 0
      %1260 = vmatprep.subr.bf16.mxu0 0
      %1261 = vmatpush2.bf16.msra.mxu0 0
      %1262 = vmatprep.subr.bf16.mxu0 0
      %1263 = vmatpush2.bf16.msra.mxu0 0
      %1264 = vmatprep.subr.bf16.mxu0 0
      %1265 = vmatpush2.bf16.msra.mxu0 0
      %1266 = vmatprep.subr.bf16.mxu0 0
      %1267 = vmatpush2.bf16.msra.mxu0 0
      %1268 = vmatprep.mubr.bf16.mxu0 0
      %1269 = vmatmul.mubr.bf16.gmra.mxu0 %v1231
      %v1270 = vpop.f32.mrf.mxu0
      %v1271 = vadd.f32 0.0, %v1270
      %v1272 = vpop.f32.mrf.mxu0
      %v1273 = vpop.f32.mrf.mxu0
      %v1274 = vadd.f32 0.0, %v1273
      %v1275 = vpop.f32.mrf.mxu0
      %1276 = vdwg.mxu0
      %v1277 = vadd.f32 %v1005, %v1271
      %v1278 = vadd.f32 %v1006, %v1274
      %1279 = vrot.lane.b32.xlu0 %v457, 104
      %v1280 = vpop.permute.xlu0 %1279
      %1281 = vrot.lane.b32.xlu0 %v457, 72
      %v1282 = vpop.permute.xlu0 %1281
      %v1284 = vsel %vm462, %v1280, 0
      %v1287 = vsel %vm462, %v1282, 0
      %1289 = vmatprep.subr.bf16.mxu0 0
      %1290 = vmatpush1.bf16.xpose.msra.mxu0 0
      %1291 = vmatprep.subr.bf16.mxu0 0
      %1292 = vmatpush1.bf16.xpose.msra.mxu0 0
      %1293 = vmatprep.subr.bf16.mxu0 0
      %1294 = vmatpush1.bf16.xpose.msra.mxu0 0
      %1295 = vmatprep.subr.bf16.mxu0 0
      %1296 = vmatpush1.bf16.xpose.msra.mxu0 0
      %1297 = vmatprep.subr.bf16.mxu0 0
      %1298 = vmatpush1.bf16.xpose.msra.mxu0 0
      %1299 = vmatprep.subr.bf16.mxu0 0
      %1300 = vmatpush1.bf16.xpose.msra.mxu0 0
      %1301 = vmatprep.subr.bf16.mxu0 0
      %1302 = vmatpush1.bf16.xpose.msra.mxu0 0
      %1303 = vmatprep.subr.bf16.mxu0 0
      %1304 = vmatpush1.bf16.xpose.msra.mxu0 %v1287
      %1305 = vmatprep.subr.bf16.mxu0 0
      %1306 = vmatpush2.bf16.xpose.msra.mxu0 0
      %1307 = vmatprep.subr.bf16.mxu0 0
      %1308 = vmatpush2.bf16.xpose.msra.mxu0 0
      %1309 = vmatprep.subr.bf16.mxu0 0
      %1310 = vmatpush2.bf16.xpose.msra.mxu0 0
      %1311 = vmatprep.subr.bf16.mxu0 0
      %1312 = vmatpush2.bf16.xpose.msra.mxu0 0
      %1313 = vmatprep.subr.bf16.mxu0 0
      %1314 = vmatpush2.bf16.xpose.msra.mxu0 0
      %1315 = vmatprep.subr.bf16.mxu0 0
      %1316 = vmatpush2.bf16.xpose.msra.mxu0 0
      %1317 = vmatprep.subr.bf16.mxu0 0
      %1318 = vmatpush2.bf16.xpose.msra.mxu0 0
      %1319 = vmatprep.subr.bf16.mxu0 0
      %1320 = vmatpush2.bf16.xpose.msra.mxu0 0
      %1321 = vmatprep.mubr.bf16.mxu0 0
      %1322 = vmatmul.mubr.bf16.gmra.mxu0 %v1284
      %v1323 = vpop.f32.mrf.mxu0
      %v1324 = vadd.f32 0.0, %v1323
      %v1325 = vpop.f32.mrf.mxu0
      %v1326 = vpop.f32.mrf.mxu0
      %v1327 = vpop.f32.mrf.mxu0
      %1328 = vdwg.mxu0
      %1329 = vrot.lane.b32.xlu0 %v458, 104
      %v1330 = vpop.permute.xlu0 %1329
      %1331 = vrot.lane.b32.xlu0 %v458, 72
      %v1332 = vpop.permute.xlu0 %1331
      %v1334 = vsel %vm462, %v1330, 0
      %v1337 = vsel %vm462, %v1332, 0
      %1339 = vmatprep.subr.bf16.mxu0 0
      %1340 = vmatpush1.bf16.xpose.msra.mxu0 0
      %1341 = vmatprep.subr.bf16.mxu0 0
      %1342 = vmatpush1.bf16.xpose.msra.mxu0 0
      %1343 = vmatprep.subr.bf16.mxu0 0
      %1344 = vmatpush1.bf16.xpose.msra.mxu0 0
      %1345 = vmatprep.subr.bf16.mxu0 0
      %1346 = vmatpush1.bf16.xpose.msra.mxu0 0
      %1347 = vmatprep.subr.bf16.mxu0 0
      %1348 = vmatpush1.bf16.xpose.msra.mxu0 0
      %1349 = vmatprep.subr.bf16.mxu0 0
      %1350 = vmatpush1.bf16.xpose.msra.mxu0 0
      %1351 = vmatprep.subr.bf16.mxu0 0
      %1352 = vmatpush1.bf16.xpose.msra.mxu0 0
      %1353 = vmatprep.subr.bf16.mxu0 0
      %1354 = vmatpush1.bf16.xpose.msra.mxu0 %v1337
      %1355 = vmatprep.subr.bf16.mxu0 0
      %1356 = vmatpush2.bf16.xpose.msra.mxu0 0
      %1357 = vmatprep.subr.bf16.mxu0 0
      %1358 = vmatpush2.bf16.xpose.msra.mxu0 0
      %1359 = vmatprep.subr.bf16.mxu0 0
      %1360 = vmatpush2.bf16.xpose.msra.mxu0 0
      %1361 = vmatprep.subr.bf16.mxu0 0
      %1362 = vmatpush2.bf16.xpose.msra.mxu0 0
      %1363 = vmatprep.subr.bf16.mxu0 0
      %1364 = vmatpush2.bf16.xpose.msra.mxu0 0
      %1365 = vmatprep.subr.bf16.mxu0 0
      %1366 = vmatpush2.bf16.xpose.msra.mxu0 0
      %1367 = vmatprep.subr.bf16.mxu0 0
      %1368 = vmatpush2.bf16.xpose.msra.mxu0 0
      %1369 = vmatprep.subr.bf16.mxu0 0
      %1370 = vmatpush2.bf16.xpose.msra.mxu0 0
      %1371 = vmatprep.mubr.bf16.mxu0 0
      %1372 = vmatmul.mubr.bf16.gmra.mxu0 %v1334
      %v1373 = vpop.f32.mrf.mxu0
      %v1374 = vadd.f32 0.0, %v1373
      %v1375 = vpop.f32.mrf.mxu0
      %v1376 = vpop.f32.mrf.mxu0
      %v1377 = vpop.f32.mrf.mxu0
      %1378 = vdwg.mxu0
      %v1379 = vmul.f32 %v1324, 0.35355338
      %v1380 = vmul.f32 %v1374, 0.35355338
      %v1381 = vsel %vm462, %v1379, -inf
      %1382 = vmax.xlane.f32.xlu0 %v1381
      %v1383 = vpop.xlane.xlu0 %1382
      %v1384 = vsel %vm462, %v1380, -inf
      %1385 = vmax.xlane.f32.xlu0 %v1384
      %v1386 = vpop.xlane.xlu0 %1385
      %v1387 = vsub.f32 %v1379, %v1383
      %v1388 = vsub.f32 %v1380, %v1386
      %v1389 = vmul.f32 %v1387, 1.442695
      %v1390 = vpow.pop %v1389
      %v1391 = vmul.f32 %v1388, 1.442695
      %v1392 = vpow.pop %v1391
      %v1393 = vsel %vm462, %v1390, 0.0
      %1394 = vadd.xlane.f32.xlu0 %v1393
      %v1395 = vpop.xlane.xlu0 %1394
      %v1396 = vsel %vm462, %v1392, 0.0
      %1397 = vadd.xlane.f32.xlu0 %v1396
      %v1398 = vpop.xlane.xlu0 %1397
      %v1399 = vrcp.pop %v1395
      %v1400 = vmul.f32 %v1390, %v1399
      %v1401 = vrcp.pop %v1398
      %v1402 = vmul.f32 %v1392, %v1401
      %v1403 = vpack.c.bf16 %v1400, %v1400
      %v1404 = vpack.c.bf16 %v1402, %v1402
      %1405 = vrot.lane.b32.xlu0 %v457, 40
      %v1406 = vpop.permute.xlu0 %1405
      %v1408 = vsel %vm462, %v1403, 0
      %v1411 = vsel %vm589, %v1406, 0
      %1413 = vmatprep.subr.bf16.mxu0 0
      %1414 = vmatpush1.bf16.msra.mxu0 0
      %1415 = vmatprep.subr.bf16.mxu0 0
      %1416 = vmatpush1.bf16.msra.mxu0 0
      %1417 = vmatprep.subr.bf16.mxu0 0
      %1418 = vmatpush1.bf16.msra.mxu0 0
      %1419 = vmatprep.subr.bf16.mxu0 0
      %1420 = vmatpush1.bf16.msra.mxu0 0
      %1421 = vmatprep.subr.bf16.mxu0 0
      %1422 = vmatpush1.bf16.msra.mxu0 0
      %1423 = vmatprep.subr.bf16.mxu0 0
      %1424 = vmatpush1.bf16.msra.mxu0 0
      %1425 = vmatprep.subr.bf16.mxu0 0
      %1426 = vmatpush1.bf16.msra.mxu0 0
      %1427 = vmatprep.subr.bf16.mxu0 0
      %1428 = vmatpush1.bf16.msra.mxu0 %v1411
      %1429 = vmatprep.subr.bf16.mxu0 0
      %1430 = vmatpush2.bf16.msra.mxu0 0
      %1431 = vmatprep.subr.bf16.mxu0 0
      %1432 = vmatpush2.bf16.msra.mxu0 0
      %1433 = vmatprep.subr.bf16.mxu0 0
      %1434 = vmatpush2.bf16.msra.mxu0 0
      %1435 = vmatprep.subr.bf16.mxu0 0
      %1436 = vmatpush2.bf16.msra.mxu0 0
      %1437 = vmatprep.subr.bf16.mxu0 0
      %1438 = vmatpush2.bf16.msra.mxu0 0
      %1439 = vmatprep.subr.bf16.mxu0 0
      %1440 = vmatpush2.bf16.msra.mxu0 0
      %1441 = vmatprep.subr.bf16.mxu0 0
      %1442 = vmatpush2.bf16.msra.mxu0 0
      %1443 = vmatprep.subr.bf16.mxu0 0
      %1444 = vmatpush2.bf16.msra.mxu0 0
      %1445 = vmatprep.mubr.bf16.mxu0 0
      %1446 = vmatmul.mubr.bf16.gmra.mxu0 %v1408
      %v1447 = vpop.f32.mrf.mxu0
      %v1448 = vadd.f32 0.0, %v1447
      %v1449 = vpop.f32.mrf.mxu0
      %v1450 = vpop.f32.mrf.mxu0
      %v1451 = vpop.f32.mrf.mxu0
      %1452 = vdwg.mxu0
      %1453 = vrot.lane.b32.xlu0 %v458, 40
      %v1454 = vpop.permute.xlu0 %1453
      %v1456 = vsel %vm462, %v1404, 0
      %v1459 = vsel %vm589, %v1454, 0
      %1461 = vmatprep.subr.bf16.mxu0 0
      %1462 = vmatpush1.bf16.msra.mxu0 0
      %1463 = vmatprep.subr.bf16.mxu0 0
      %1464 = vmatpush1.bf16.msra.mxu0 0
      %1465 = vmatprep.subr.bf16.mxu0 0
      %1466 = vmatpush1.bf16.msra.mxu0 0
      %1467 = vmatprep.subr.bf16.mxu0 0
      %1468 = vmatpush1.bf16.msra.mxu0 0
      %1469 = vmatprep.subr.bf16.mxu0 0
      %1470 = vmatpush1.bf16.msra.mxu0 0
      %1471 = vmatprep.subr.bf16.mxu0 0
      %1472 = vmatpush1.bf16.msra.mxu0 0
      %1473 = vmatprep.subr.bf16.mxu0 0
      %1474 = vmatpush1.bf16.msra.mxu0 0
      %1475 = vmatprep.subr.bf16.mxu0 0
      %1476 = vmatpush1.bf16.msra.mxu0 %v1459
      %1477 = vmatprep.subr.bf16.mxu0 0
      %1478 = vmatpush2.bf16.msra.mxu0 0
      %1479 = vmatprep.subr.bf16.mxu0 0
      %1480 = vmatpush2.bf16.msra.mxu0 0
      %1481 = vmatprep.subr.bf16.mxu0 0
      %1482 = vmatpush2.bf16.msra.mxu0 0
      %1483 = vmatprep.subr.bf16.mxu0 0
      %1484 = vmatpush2.bf16.msra.mxu0 0
      %1485 = vmatprep.subr.bf16.mxu0 0
      %1486 = vmatpush2.bf16.msra.mxu0 0
      %1487 = vmatprep.subr.bf16.mxu0 0
      %1488 = vmatpush2.bf16.msra.mxu0 0
      %1489 = vmatprep.subr.bf16.mxu0 0
      %1490 = vmatpush2.bf16.msra.mxu0 0
      %1491 = vmatprep.subr.bf16.mxu0 0
      %1492 = vmatpush2.bf16.msra.mxu0 0
      %1493 = vmatprep.mubr.bf16.mxu0 0
      %1494 = vmatmul.mubr.bf16.gmra.mxu0 %v1456
      %v1495 = vpop.f32.mrf.mxu0
      %v1496 = vadd.f32 0.0, %v1495
      %v1497 = vpop.f32.mrf.mxu0
      %v1498 = vpop.f32.mrf.mxu0
      %v1499 = vpop.f32.mrf.mxu0
      %1500 = vdwg.mxu0
      %v1501 = vpack.c.bf16 %v1496, %v1448
      %v1503 = vsel %vm462, %v1501, 0
      %v1506 = vsel %vm589, %v375, 0
      %1508 = vmatprep.subr.bf16.mxu0 0
      %1509 = vmatpush1.bf16.msra.mxu0 0
      %1510 = vmatprep.subr.bf16.mxu0 0
      %1511 = vmatpush1.bf16.msra.mxu0 0
      %1512 = vmatprep.subr.bf16.mxu0 0
      %1513 = vmatpush1.bf16.msra.mxu0 0
      %1514 = vmatprep.subr.bf16.mxu0 0
      %1515 = vmatpush1.bf16.msra.mxu0 0
      %1516 = vmatprep.subr.bf16.mxu0 0
      %1517 = vmatpush1.bf16.msra.mxu0 0
      %1518 = vmatprep.subr.bf16.mxu0 0
      %1519 = vmatpush1.bf16.msra.mxu0 0
      %1520 = vmatprep.subr.bf16.mxu0 0
      %1521 = vmatpush1.bf16.msra.mxu0 0
      %1522 = vmatprep.subr.bf16.mxu0 0
      %1523 = vmatpush1.bf16.msra.mxu0 %v1506
      %1524 = vmatprep.subr.bf16.mxu0 0
      %1525 = vmatpush2.bf16.msra.mxu0 0
      %1526 = vmatprep.subr.bf16.mxu0 0
      %1527 = vmatpush2.bf16.msra.mxu0 0
      %1528 = vmatprep.subr.bf16.mxu0 0
      %1529 = vmatpush2.bf16.msra.mxu0 0
      %1530 = vmatprep.subr.bf16.mxu0 0
      %1531 = vmatpush2.bf16.msra.mxu0 0
      %1532 = vmatprep.subr.bf16.mxu0 0
      %1533 = vmatpush2.bf16.msra.mxu0 0
      %1534 = vmatprep.subr.bf16.mxu0 0
      %1535 = vmatpush2.bf16.msra.mxu0 0
      %1536 = vmatprep.subr.bf16.mxu0 0
      %1537 = vmatpush2.bf16.msra.mxu0 0
      %1538 = vmatprep.subr.bf16.mxu0 0
      %1539 = vmatpush2.bf16.msra.mxu0 0
      %1540 = vmatprep.mubr.bf16.mxu0 0
      %1541 = vmatmul.mubr.bf16.gmra.mxu0 %v1503
      %v1542 = vpop.f32.mrf.mxu0
      %v1543 = vadd.f32 0.0, %v1542
      %v1544 = vpop.f32.mrf.mxu0
      %v1545 = vpop.f32.mrf.mxu0
      %v1546 = vadd.f32 0.0, %v1545
      %v1547 = vpop.f32.mrf.mxu0
      %1548 = vdwg.mxu0
      %v1549 = vadd.f32 %v1277, %v1543
      %v1550 = vadd.f32 %v1278, %v1546
      %v1551 = vadd.f32 %v361, %v1549
      %v1552 = vadd.f32 %v362, %v1550
      %v1553 = vsel %vm412, %v1551, 0.0
      %1554 = vadd.xlane.f32.xlu0 %v1553
      %v1555 = vpop.xlane.xlu0 %1554
      %v1556 = vsel %vm412, %v1552, 0.0
      %1557 = vadd.xlane.f32.xlu0 %v1556
      %v1558 = vpop.xlane.xlu0 %1557
      %v1559 = vrcp.pop 32.0
      %v1560 = vmul.f32 %v1555, %v1559
      %v1561 = vmul.f32 %v1558, %v1559
      %v1562 = vsub.f32 %v1551, %v1560
      %v1563 = vsub.f32 %v1552, %v1561
      %v1564 = vmul.f32 %v1562, %v1562
      %v1565 = vmul.f32 %v1563, %v1563
      %v1566 = vsel %vm412, %v1564, 0.0
      %1567 = vadd.xlane.f32.xlu0 %v1566
      %v1568 = vpop.xlane.xlu0 %1567
      %v1569 = vsel %vm412, %v1565, 0.0
      %1570 = vadd.xlane.f32.xlu0 %v1569
      %v1571 = vpop.xlane.xlu0 %1570
      %v1572 = vmul.f32 %v1568, %v1559
      %v1573 = vmul.f32 %v1571, %v1559
      %v1574 = vadd.f32 %v1572, 1e-05
      %v1575 = vadd.f32 %v1573, 1e-05
      %v1576 = vrsqrt.pop %v1574
      %v1577 = vrsqrt.pop %v1575
      %v1578 = vmul.f32 %v1562, %v1576
      %v1579 = vmul.f32 %v1563, %v1577
      %v1580 = vlaneseq
      %v1581 = vshrl.u32 %v1580, 7
      %v1582 = vsub.s32 4, %v1581
      %v1583 = vrot.slane %v394, %v1582
      %v1584 = vmul.f32 %v1578, %v1583
      %v1585 = vmul.f32 %v1579, %v1583
      %v1586 = vlaneseq
      %v1587 = vshrl.u32 %v1586, 7
      %v1588 = vsub.s32 5, %v1587
      %v1589 = vrot.slane %v394, %v1588
      %v1590 = vadd.f32 %v1584, %v1589
      %v1591 = vadd.f32 %v1585, %v1589
      %v1592 = vpack.c.bf16 %v1591, %v1590
      %v1593 = vlaneseq
      %v1594 = vshrl.u32 %v1593, 7
      %v1595 = vsub.s32 2, %v1594
      %v1596 = vrot.slane %v394, %v1595
      %v1601 = vunpack.c.l.b16 %v378
      %v1602 = vunpack.c.l.b16 %v379
      %v1603 = vunpack.c.l.b16 %v380
      %v1604 = vunpack.c.l.b16 %v381
      %v1605 = vpack.c.b16 %v1602, %v1601
      %v1606 = vpack.c.b16 %v1604, %v1603
      %v1610 = vsel %vm412, %v1592, 0
      %1612 = vmatprep.subr.bf16.mxu0 0
      %1613 = vmatpush1.bf16.msra.mxu0 0
      %1614 = vmatprep.subr.bf16.mxu0 0
      %1615 = vmatpush1.bf16.msra.mxu0 0
      %1616 = vmatprep.subr.bf16.mxu0 0
      %1617 = vmatpush1.bf16.msra.mxu0 0
      %1618 = vmatprep.subr.bf16.mxu0 0
      %1619 = vmatpush1.bf16.msra.mxu0 0
      %1620 = vmatprep.subr.bf16.mxu0 0
      %1621 = vmatpush1.bf16.msra.mxu0 0
      %1622 = vmatprep.subr.bf16.mxu0 0
      %1623 = vmatpush1.bf16.msra.mxu0 0
      %1624 = vmatprep.subr.bf16.mxu0 0
      %1625 = vmatpush1.bf16.msra.mxu0 %v1606
      %1626 = vmatprep.subr.bf16.mxu0 0
      %1627 = vmatpush1.bf16.msra.mxu0 %v1605
      %1628 = vmatprep.subr.bf16.mxu0 0
      %1629 = vmatpush2.bf16.msra.mxu0 0
      %1630 = vmatprep.subr.bf16.mxu0 0
      %1631 = vmatpush2.bf16.msra.mxu0 0
      %1632 = vmatprep.subr.bf16.mxu0 0
      %1633 = vmatpush2.bf16.msra.mxu0 0
      %1634 = vmatprep.subr.bf16.mxu0 0
      %1635 = vmatpush2.bf16.msra.mxu0 0
      %1636 = vmatprep.subr.bf16.mxu0 0
      %1637 = vmatpush2.bf16.msra.mxu0 0
      %1638 = vmatprep.subr.bf16.mxu0 0
      %1639 = vmatpush2.bf16.msra.mxu0 0
      %1640 = vmatprep.subr.bf16.mxu0 0
      %1641 = vmatpush2.bf16.msra.mxu0 0
      %1642 = vmatprep.subr.bf16.mxu0 0
      %1643 = vmatpush2.bf16.msra.mxu0 0
      %1644 = vmatprep.mubr.bf16.mxu0 0
      %1645 = vmatmul.mubr.bf16.gmra.mxu0 %v1610
      %v1646 = vpop.f32.mrf.mxu0
      %v1647 = vadd.f32 %v1596, %v1646
      %v1648 = vpop.f32.mrf.mxu0
      %v1649 = vpop.f32.mrf.mxu0
      %v1650 = vadd.f32 %v1596, %v1649
      %v1651 = vpop.f32.mrf.mxu0
      %1652 = vdwg.mxu0
      %v1653 = vmax.f32 %v1647, 0.0
      %v1654 = vmax.f32 %v1650, 0.0
      %v1655 = vpack.c.bf16 %v1654, %v1653
      %v1656 = vlaneseq
      %v1657 = vshrl.u32 %v1656, 7
      %v1658 = vsub.s32 3, %v1657
      %v1659 = vrot.slane %v394, %v1658
      %v1668 = vunpack.c.l.b16 %v385
      %v1669 = vunpack.c.l.b16 %v386
      %v1670 = vunpack.c.l.b16 %v387
      %v1671 = vunpack.c.l.b16 %v388
      %v1672 = vunpack.c.l.b16 %v389
      %v1673 = vunpack.c.l.b16 %v390
      %v1674 = vunpack.c.l.b16 %v391
      %v1675 = vunpack.c.l.b16 %v392
      %v1676 = vpack.c.b16 %v1669, %v1668
      %v1677 = vpack.c.b16 %v1671, %v1670
      %v1678 = vpack.c.b16 %v1673, %v1672
      %v1679 = vpack.c.b16 %v1675, %v1674
      %vm1684 = vcmask 523264
      %v1686 = vsel %vm1684, %v1655, 0
      %1688 = vmatprep.subr.bf16.mxu0 0
      %1689 = vmatpush1.bf16.msra.mxu0 0
      %1690 = vmatprep.subr.bf16.mxu0 0
      %1691 = vmatpush1.bf16.msra.mxu0 0
      %1692 = vmatprep.subr.bf16.mxu0 0
      %1693 = vmatpush1.bf16.msra.mxu0 0
      %1694 = vmatprep.subr.bf16.mxu0 0
      %1695 = vmatpush1.bf16.msra.mxu0 0
      %1696 = vmatprep.subr.bf16.mxu0 0
      %1697 = vmatpush1.bf16.msra.mxu0 %v1679
      %1698 = vmatprep.subr.bf16.mxu0 0
      %1699 = vmatpush1.bf16.msra.mxu0 %v1678
      %1700 = vmatprep.subr.bf16.mxu0 0
      %1701 = vmatpush1.bf16.msra.mxu0 %v1677
      %1702 = vmatprep.subr.bf16.mxu0 0
      %1703 = vmatpush1.bf16.msra.mxu0 %v1676
      %1704 = vmatprep.subr.bf16.mxu0 0
      %1705 = vmatpush2.bf16.msra.mxu0 0
      %1706 = vmatprep.subr.bf16.mxu0 0
      %1707 = vmatpush2.bf16.msra.mxu0 0
      %1708 = vmatprep.subr.bf16.mxu0 0
      %1709 = vmatpush2.bf16.msra.mxu0 0
      %1710 = vmatprep.subr.bf16.mxu0 0
      %1711 = vmatpush2.bf16.msra.mxu0 0
      %1712 = vmatprep.subr.bf16.mxu0 0
      %1713 = vmatpush2.bf16.msra.mxu0 0
      %1714 = vmatprep.subr.bf16.mxu0 0
      %1715 = vmatpush2.bf16.msra.mxu0 0
      %1716 = vmatprep.subr.bf16.mxu0 0
      %1717 = vmatpush2.bf16.msra.mxu0 0
      %1718 = vmatprep.subr.bf16.mxu0 0
      %1719 = vmatpush2.bf16.msra.mxu0 0
      %1720 = vmatprep.mubr.bf16.mxu0 0
      %1721 = vmatmul.mubr.bf16.gmra.mxu0 %v1686
      %v1722 = vpop.f32.mrf.mxu0
      %v1723 = vadd.f32 %v1659, %v1722
      %v1724 = vpop.f32.mrf.mxu0
      %v1725 = vpop.f32.mrf.mxu0
      %v1726 = vadd.f32 %v1659, %v1725
      %v1727 = vpop.f32.mrf.mxu0
      %1728 = vdwg.mxu0
      %v1729 = vadd.f32 %v1590, %v1723
      %v1730 = vadd.f32 %v1591, %v1726
      %v1731 = vsel %vm412, %v1729, 0.0
      %1732 = vadd.xlane.f32.xlu0 %v1731
      %v1733 = vpop.xlane.xlu0 %1732
      %v1734 = vsel %vm412, %v1730, 0.0
      %1735 = vadd.xlane.f32.xlu0 %v1734
      %v1736 = vpop.xlane.xlu0 %1735
      %v1737 = vmul.f32 %v1733, %v1559
      %v1738 = vmul.f32 %v1736, %v1559
      %v1739 = vsub.f32 %v1729, %v1737
      %v1740 = vsub.f32 %v1730, %v1738
      %v1741 = vmul.f32 %v1739, %v1739
      %v1742 = vmul.f32 %v1740, %v1740
      %v1743 = vsel %vm412, %v1741, 0.0
      %1744 = vadd.xlane.f32.xlu0 %v1743
      %v1745 = vpop.xlane.xlu0 %1744
      %v1746 = vsel %vm412, %v1742, 0.0
      %1747 = vadd.xlane.f32.xlu0 %v1746
      %v1748 = vpop.xlane.xlu0 %1747
      %v1749 = vmul.f32 %v1745, %v1559
      %v1750 = vmul.f32 %v1748, %v1559
      %v1751 = vadd.f32 %v1749, 1e-05
      %v1752 = vadd.f32 %v1750, 1e-05
      %v1753 = vrsqrt.pop %v1751
      %v1754 = vrsqrt.pop %v1752
      %v1755 = vmul.f32 %v1739, %v1753
      %v1756 = vmul.f32 %v1740, %v1754
      %v1757 = vlaneseq
      %v1758 = vshrl.u32 %v1757, 7
      %v1759 = vsub.s32 6, %v1758
      %v1760 = vrot.slane %v394, %v1759
      %v1761 = vmul.f32 %v1755, %v1760
      %v1762 = vmul.f32 %v1756, %v1760
      %v1763 = vlaneseq
      %v1764 = vshrl.u32 %v1763, 7
      %v1765 = vsub.s32 7, %v1764
      %v1766 = vrot.slane %v394, %v1765
      %v1767 = vadd.f32 %v1761, %v1766
      %v1768 = vadd.f32 %v1762, %v1766
      %1769 = vst.msk [vmem:[#allocation2] sm:$0xff] %vm412, %v1767
      %1770 = vst.msk [vmem:[#allocation2 + $0x8] sm:$0xff] %vm412, %v1768
      %p1771 = scmp.eq.s32.totalorder %s25, 1
      // Predicated region
      $region61: #{decoder_forward.1} parent=55 // pred_check
        %p1772 = pneg %p1771
      $region62: #{decoder_forward.1} parent=55 // pred_check_branch
        %1774 = sbr.rel (%p1772) target = $region64
      $region63: #{decoder_forward.1} parent=55 // pred_region
        %v1775 = vpack.c.bf16 %v1768, %v1767
        %v1776 = vld [vmem:[%s7] sm:$0xf]
        %v1777 = vld [vmem:[%s7 + $0x4] sm:$0xf]
        %v1778 = vld [vmem:[%s7 + $0x8] sm:$0xf]
        %v1779 = vld [vmem:[%s7 + $0xc] sm:$0xf]
        %v1780 = vld [vmem:[%s8] sm:$0x1]
        %v1782 = vlaneseq
        %v1783 = vshrl.u32 %v1782, 7
        %v1784 = vsub.s32 0, %v1783
        %v1785 = vrot.slane %v1780, %v1784
        %v1791 = vunpack.c.l.b16 %v1776
        %v1792 = vunpack.c.l.b16 %v1777
        %v1793 = vunpack.c.l.b16 %v1778
        %v1794 = vunpack.c.l.b16 %v1779
        %v1795 = vpack.c.b16 %v1792, %v1791
        %v1796 = vpack.c.b16 %v1794, %v1793
        %v1800 = vsel %vm412, %v1775, 0
        %1802 = vmatprep.subr.bf16.mxu0 0
        %1803 = vmatpush1.bf16.msra.mxu0 0
        %1804 = vmatprep.subr.bf16.mxu0 0
        %1805 = vmatpush1.bf16.msra.mxu0 0
        %1806 = vmatprep.subr.bf16.mxu0 0
        %1807 = vmatpush1.bf16.msra.mxu0 0
        %1808 = vmatprep.subr.bf16.mxu0 0
        %1809 = vmatpush1.bf16.msra.mxu0 0
        %1810 = vmatprep.subr.bf16.mxu0 0
        %1811 = vmatpush1.bf16.msra.mxu0 0
        %1812 = vmatprep.subr.bf16.mxu0 0
        %1813 = vmatpush1.bf16.msra.mxu0 0
        %1814 = vmatprep.subr.bf16.mxu0 0
        %1815 = vmatpush1.bf16.msra.mxu0 %v1796
        %1816 = vmatprep.subr.bf16.mxu0 0
        %1817 = vmatpush1.bf16.msra.mxu0 %v1795
        %1818 = vmatprep.subr.bf16.mxu0 0
        %1819 = vmatpush2.bf16.msra.mxu0 0
        %1820 = vmatprep.subr.bf16.mxu0 0
        %1821 = vmatpush2.bf16.msra.mxu0 0
        %1822 = vmatprep.subr.bf16.mxu0 0
        %1823 = vmatpush2.bf16.msra.mxu0 0
        %1824 = vmatprep.subr.bf16.mxu0 0
        %1825 = vmatpush2.bf16.msra.mxu0 0
        %1826 = vmatprep.subr.bf16.mxu0 0
        %1827 = vmatpush2.bf16.msra.mxu0 0
        %1828 = vmatprep.subr.bf16.mxu0 0
        %1829 = vmatpush2.bf16.msra.mxu0 0
        %1830 = vmatprep.subr.bf16.mxu0 0
        %1831 = vmatpush2.bf16.msra.mxu0 0
        %1832 = vmatprep.subr.bf16.mxu0 0
        %1833 = vmatpush2.bf16.msra.mxu0 0
        %1834 = vmatprep.mubr.bf16.mxu0 0
        %1835 = vmatmul.mubr.bf16.gmra.mxu0 %v1800
        %v1836 = vpop.f32.mrf.mxu0
        %v1837 = vadd.f32 %v1785, %v1836
        %v1838 = vpop.f32.mrf.mxu0
        %v1839 = vpop.f32.mrf.mxu0
        %v1840 = vadd.f32 %v1785, %v1839
        %v1841 = vpop.f32.mrf.mxu0
        %1842 = vdwg.mxu0
        %1843 = vst [vmem:[%s346] sm:$0xff] %v1837
        %1844 = vst [vmem:[%s346 + $0x8] sm:$0xff] %v1840
      $region64: #{decoder_forward.1} parent=55 // pred_fallthru
        _
      %s1845 = smul.u32 2, %s24
      %p1846 = scmp.lt.s32.totalorder %s1845, 1
      %s1847 = scalar_select %p1846, %s1845, 1
      %s1848 = smul.addr %s1847, 8
      %s1849 = scalar_lea.vmem %s9, %s1848
      // Predicated region
      $region65: #{decoder_forward.1} parent=55 // pred_check
        %p1850 = pneg %p244
      $region66: #{decoder_forward.1} parent=55 // pred_check_branch
        %1852 = sbr.rel (%p1850) target = $region68
      $region67: #{decoder_forward.1} parent=55 // pred_region
        %s1853 = smul.u32 2, %s24
      $region68: #{decoder_forward.1} parent=55 // pred_fallthru
        _
      // Predicated region
      $region69: #{decoder_forward.1} parent=55 // pred_check
        %p1854 = pneg %p244
      $region70: #{decoder_forward.1} parent=55 // pred_check_branch
        %1856 = sbr.rel (%p1854) target = $region72
      $region71: #{decoder_forward.1} parent=55 // pred_region
        %s1857 = smul.u32 2, %s24
        %p1858 = scmp.lt.s32.totalorder %s1857, 1
        %s1859 = scalar_select %p1858, %s1857, 1
        %s1860 = smul.addr %s1859, 8
        %s1861 = scalar_lea.vmem %s9, %s1860
      $region72: #{decoder_forward.1} parent=55 // pred_fallthru
        _
    $region56: #{decoder_forward.1} parent=5 // pred_fallthru
      _
    %p1862 = scmp.le.s32.totalorder 2, %s15
    // Predicated region
    $region73: #{decoder_forward.1} parent=5 // pred_check
      %p1863 = pneg %p1862
    $region74: #{decoder_forward.1} parent=5 // pred_check_branch
      %1865 = sbr.rel (%p1863) target = $region76
    $region75: #{decoder_forward.1} parent=5 // pred_region
      %s1866 = ssub.s32 %s15, 2
    $region76: #{decoder_forward.1} parent=5 // pred_fallthru
      _
  $region6: #{decoder_forward.1} parent=0 // loop_footer
    %s19 = sadd.s32 1, %s15
  $region7: #{decoder_forward.1} parent=0 // loop_footer_branch
    %14 = sbr.rel target = $region3
  $region8: #{decoder_forward.1} parent=0 // loop_exit
    _

</llo_original>
